<compile_context>
chip_gen: v6e
topology: v6e:2x2x1
jax: 0.10.0
libtpu: 0.0.40
codegen_flags: <defaults>
</compile_context>

<pallas_src>
import functools

import jax
import jax.numpy as jnp
from jax.experimental import pallas as pl
from jax.experimental.pallas import tpu as pltpu

NEG_SLOPE = 0.2  # nn.LeakyReLU(0.2)
LANE = 128


def _leaky_relu(v):
    return jnp.where(v > 0, v, NEG_SLOPE * v)


def _round_up(v, m):
    return (v + m - 1) // m * m


def _vmem_limit_bytes():
    cap = 64 * 1024 * 1024
    try:
        cap = int(getattr(pltpu.get_tpu_info(), "vmem_capacity_bytes", cap))
    except Exception:
        pass
    # ~3/4 of physical VMEM, capped at 100 MiB (v5e/v6e ~96-100 MiB, v7x 48 MiB)
    return int(min(cap * 3 // 4, 100 * 1024 * 1024))


# -----------------------------------------------------------------------------
# Kernel: one grid step == one time step p through all GMNL layers
# -----------------------------------------------------------------------------
def _gmn_kernel(whead_ref, h0_ref, wemb_ref, init_ref,
                grow_ref, gcol_ref, scat_ref, extra_ref,
                we1_ref, be1_ref, we2_ref, be2_ref,
                wc1_ref, bc1_ref, wc2_ref, bc2_ref,
                wn1_ref, bn1_ref, wn2_ref, bn2_ref,
                s_out_ref, head_out_ref,
                he_ref,
                *, n_layers, hidden, n_coord, coords_weight, num_future):
    p = pl.program_id(0)
    H = hidden
    C = init_ref.shape[-1]

    # lane masks (hoisted out of the layer loop)
    lane = jax.lax.broadcasted_iota(jnp.int32, (1, C), 1)
    xmask = ((lane >= H) & (lane < H + n_coord)).astype(jnp.float32)
    xmask_w = xmask * coords_weight
    lane0 = (lane == 0).astype(jnp.float32)          # radial slot of 'extra'

    # ---- prologue: node embedding is step-invariant -> compute once (p == 0)
    @pl.when(p == 0)
    def _():
        he_ref[...] = jnp.dot(h0_ref[...], wemb_ref[...],
                              preferred_element_type=jnp.float32)

    # state slab [N, C]: lanes [0,H) = h (+ time embedding), [H,H+n_coord) = x
    s0 = he_ref[...] + init_ref[0]

    Grow = grow_ref[...]     # [E, N] one-hot edge source
    Gcol = gcol_ref[...]     # [E, N] one-hot edge target
    Scat = scat_ref[...]     # [N, E] scatter-add (= Grow^T)
    extra = extra_ref[...]   # [E, C] lane0 reserved for radial, lanes [1,1+EA)=edge_attr

    def layer(l, s):
        # gather node state at edge endpoints
        # TODO(synk): replace with index-driven gather for large E*N.
        src = jnp.dot(Grow, s, preferred_element_type=jnp.float32)   # [E, C]
        dst = jnp.dot(Gcol, s, preferred_element_type=jnp.float32)
        diff = (src - dst) * xmask                                   # coord lanes only
        radial = jnp.sum(diff * diff, axis=-1, keepdims=True)        # [E, 1]

        # edge MLP stage 1: single K=3C matmul over [src | dst | radial+edge_attr]
        xcat = jnp.concatenate([src, dst, extra + radial * lane0], axis=-1)
        m1 = _leaky_relu(
            jnp.dot(xcat, we1_ref[l], preferred_element_type=jnp.float32)
            + be1_ref[l])                                            # [E, H]
        m = _leaky_relu(
            jnp.dot(m1, we2_ref[l], preferred_element_type=jnp.float32)
            + be2_ref[l])                                            # [E, C] (h lanes)

        # coordinate MLP; phi via lane-reduce instead of a 1-wide matmul
        c = _leaky_relu(
            jnp.dot(m, wc1_ref[l], preferred_element_type=jnp.float32)
            + bc1_ref[l])                                            # [E, H]
        phi = jnp.sum(c * wc2_ref[l], axis=-1, keepdims=True) + bc2_ref[l]

        # combined message: h lanes = m, coord lanes = coord_diff * phi
        msg = m + diff * phi                                         # [E, C]
        agg = jnp.dot(Scat, msg, preferred_element_type=jnp.float32)  # [N, C]

        # node MLP: single K=2C matmul over [h | agg]; residual update
        ncat = jnp.concatenate([s, agg], axis=-1)
        n1 = _leaky_relu(
            jnp.dot(ncat, wn1_ref[l], preferred_element_type=jnp.float32)
            + bn1_ref[l])                                            # [N, H]
        n2 = jnp.dot(n1, wn2_ref[l], preferred_element_type=jnp.float32) + bn2_ref[l]

        return s + n2 + agg * xmask_w

    s = jax.lax.fori_loop(0, n_layers, layer, s0)

    # per-step final state (coords live in lanes [H, H+n_coord))
    s_out_ref[0] = s

    # readout: head[f] = sum_p softmax(theta)[f, p] * s_p  (VMEM accumulator)
    @pl.when(p == 0)
    def _():
        head_out_ref[...] = jnp.zeros_like(head_out_ref)
    for f in range(num_future):
        head_out_ref[f] = head_out_ref[f] + whead_ref[f, p] * s


# -----------------------------------------------------------------------------
# Wrapper
# -----------------------------------------------------------------------------
@functools.partial(jax.jit, static_argnames=("coords_weight",))
def gmn_forward(params, h0, x, rows, cols, edge_attr, coords_weight=3.0):
    P, N, T, Sdim = x.shape
    E = rows.shape[0]
    Fin = h0.shape[1]
    H = params['we'].shape[1]
    EA = edge_attr.shape[1]
    CS = T * Sdim
    C = _round_up(H + CS, LANE)          # lane-dense state width
    L = len(params['layers'])
    F = params['theta'].shape[0]
    f32 = jnp.float32

    # --- graph glue: per-step [E, N] one-hots (shared across the P axis)
    Grow = jax.nn.one_hot(rows, N, dtype=f32)            # [E, N] edge source
    Gcol = jax.nn.one_hot(cols, N, dtype=f32)            # [E, N] edge target
    Scat = jnp.transpose(Grow)                           # [N, E] scatter-add

    # static edge features: lane 0 reserved for the per-layer radial term,
    # lanes [1, 1+EA) hold edge_attr, rest zero (keeps the kernel lane-dense)
    extra = jnp.zeros((E, C), f32).at[:, 1:1 + EA].set(edge_attr.astype(f32))

    # --- prologue layout: time embedding bias + coordinates pre-placed per step
    W_emb = jnp.zeros((Fin, C), f32).at[:, :H].set(params['we'])
    init = jnp.zeros((P, N, C), f32)
    init = init.at[:, :, :H].set(params['be'][0][None, None, :]
                                 + params['te'][:, None, :])
    init = init.at[:, :, H:H + CS].set(x.astype(f32).reshape(P, N, CS))

    whead = jax.nn.softmax(params['theta'], axis=1).astype(f32)      # [F, P]

    # --- stacked per-layer weights with merged operand blocks
    def we1_cat(q):
        w = jnp.zeros((3 * C, H), f32)
        w = w.at[0:H].set(q['we1'][:H])                              # src h lanes
        w = w.at[C:C + H].set(q['we1'][H:2 * H])                     # dst h lanes
        w = w.at[2 * C:2 * C + 1].set(q['we1'][2 * H:2 * H + 1])     # radial (lane 0)
        w = w.at[2 * C + 1:2 * C + 1 + EA].set(q['we1'][2 * H + 1:])  # edge_attr
        return w

    def wn1_cat(q):
        w = jnp.zeros((2 * C, H), f32)
        w = w.at[0:H].set(q['wn1'][:H])                              # state h lanes
        w = w.at[C:C + H].set(q['wn1'][H:2 * H])                     # agg h lanes
        return w

    def pad_rows(w):      # [K, H] -> [C, H]
        return jnp.zeros((C, w.shape[1]), f32).at[:w.shape[0]].set(w)

    def pad_cols(w):      # [K, H] -> [K, C]
        return jnp.zeros((w.shape[0], C), f32).at[:, :w.shape[1]].set(w)

    stk = lambda fn: jnp.stack([fn(q) for q in params['layers']])
    we1 = stk(we1_cat)                          # [L, 3C, H]
    be1 = stk(lambda q: q['be1'])               # [L, 1, H]
    we2 = stk(lambda q: pad_cols(q['we2']))     # [L, H, C]
    be2 = stk(lambda q: pad_cols(q['be2']))     # [L, 1, C]
    wc1 = stk(lambda q: pad_rows(q['wc1']))     # [L, C, H]
    bc1 = stk(lambda q: q['bc1'])               # [L, 1, H]
    wc2 = stk(lambda q: q['wc2'].T)             # [L, 1, H]
    bc2 = stk(lambda q: q['bc2'])               # [L, 1, 1]
    wn1 = stk(wn1_cat)                          # [L, 2C, H]
    bn1 = stk(lambda q: q['bn1'])               # [L, 1, H]
    wn2 = stk(lambda q: pad_cols(q['wn2']))     # [L, H, C]
    bn2 = stk(lambda q: pad_cols(q['bn2']))     # [L, 1, C]

    kernel = functools.partial(
        _gmn_kernel, n_layers=L, hidden=H, n_coord=CS,
        coords_weight=float(coords_weight), num_future=F)

    def full(shape):
        if len(shape) == 2:
            return pl.BlockSpec(shape, lambda i: (0, 0))
        return pl.BlockSpec(shape, lambda i: (0, 0, 0))

    in_specs = [
        pl.BlockSpec(memory_space=pltpu.MemorySpace.SMEM),           # whead scalars
        full((N, Fin)),                                              # h0
        full((Fin, C)),                                              # W_emb
        pl.BlockSpec((1, N, C), lambda i: (i, 0, 0)),                # init (per step)
        full((E, N)), full((E, N)), full((N, E)), full((E, C)),      # graph glue
        full(we1.shape), full(be1.shape), full(we2.shape), full(be2.shape),
        full(wc1.shape), full(bc1.shape), full(wc2.shape), full(bc2.shape),
        full(wn1.shape), full(bn1.shape), full(wn2.shape), full(bn2.shape),
    ]
    out_specs = (
        pl.BlockSpec((1, N, C), lambda i: (i, 0, 0)),                # per-step state
        pl.BlockSpec((F, N, C), lambda i: (0, 0, 0)),                # head accumulator
    )

    s_out, head_out = pl.pallas_call(
        kernel,
        grid=(P,),
        in_specs=in_specs,
        out_specs=out_specs,
        out_shape=(jax.ShapeDtypeStruct((P, N, C), f32),
                   jax.ShapeDtypeStruct((F, N, C), f32)),
        scratch_shapes=[pltpu.VMEM((N, C), f32)],                    # shared embedding
        compiler_params=pltpu.CompilerParams(
            dimension_semantics=("arbitrary",),   # head accumulates across steps
            vmem_limit_bytes=_vmem_limit_bytes()),
    )(whead, h0.astype(f32), W_emb, init, Grow, Gcol, Scat, extra,
      we1, be1, we2, be2, wc1, bc1, wc2, bc2, wn1, bn1, wn2, bn2)

    if P == 1:                                         # torch: x.squeeze(0)
        return s_out[0, :, H:H + CS].reshape(N, T, Sdim)
    out = head_out[:, :, H:H + CS].reshape(F, N, T, Sdim)
    if F == 1:                                         # torch: .squeeze(0)
        out = out[0]
    return out


# -----------------------------------------------------------------------------
# Deterministic parameter construction
# -----------------------------------------------------------------------------
def init_params(key, num_past, num_future, in_node_nf, in_edge_nf, hidden_nf, n_layers):
    keys = jax.random.split(key, 3 + n_layers)

    def lin(k, fan_in, fan_out):
        kw, kb = jax.random.split(k)
        bound = 1.0 / float(fan_in) ** 0.5
        w = jax.random.uniform(kw, (fan_in, fan_out), jnp.float32, -bound, bound)
        b = jax.random.uniform(kb, (1, fan_out), jnp.float32, -bound, bound)
        return w, b

    we, be = lin(keys[0], in_node_nf, hidden_nf)                          # nn.Linear
    te = jax.random.normal(keys[1], (num_past, hidden_nf), jnp.float32)   # nn.Embedding
    theta = jax.random.uniform(keys[2], (num_future, num_past),
                               jnp.float32, -1.0, 1.0)                    # theta ~ U(-1,1)

    H = hidden_nf
    layers = []
    for i in range(n_layers):
        lk = jax.random.split(keys[3 + i], 6)
        we1, be1 = lin(lk[0], 2 * H + 1 + in_edge_nf, H)
        we2, be2 = lin(lk[1], H, H)
        wc1, bc1 = lin(lk[2], H, H)
        wc2, bc2 = lin(lk[3], H, 1)
        wn1, bn1 = lin(lk[4], 2 * H, H)
        wn2, bn2 = lin(lk[5], H, H)
        layers.append(dict(we1=we1, be1=be1, we2=we2, be2=be2,
                           wc1=wc1, bc1=bc1, wc2=wc2, bc2=bc2,
                           wn1=wn1, bn1=bn1, wn2=wn2, bn2=bn2))
    return dict(we=we, be=be, te=te, theta=theta, layers=layers)


if __name__ == "__main__":
    key = jax.random.PRNGKey(0)
    num_past, num_future = 4, 2
    in_node_nf, in_edge_nf, hidden_nf = 4, 2, 32
    n_layers = 4
    N, T, S = 5, 1, 3

    k1, k2, k3, kp = jax.random.split(key, 4)
    h0 = jax.random.normal(k1, (N, in_node_nf), jnp.float32)
    x = jax.random.normal(k2, (num_past, N, T, S), jnp.float32)

    # fully-connected directed graph without self loops
    rows, cols = [], []
    for i in range(N):
        for j in range(N):
            if i != j:
                rows.append(i)
                cols.append(j)
    rows = jnp.array(rows, jnp.int32)
    cols = jnp.array(cols, jnp.int32)
    edge_attr = jax.random.normal(k3, (rows.shape[0], in_edge_nf), jnp.float32)

    params = init_params(kp, num_past, num_future, in_node_nf, in_edge_nf,
                         hidden_nf, n_layers)

    out = gmn_forward(params, h0, x, rows, cols, edge_attr, coords_weight=3.0)
    jax.block_until_ready(out)
    print("KERNEL_OK")
</pallas_src>

<mosaic_0001>
module attributes {stable_mosaic.version = 11 : i64} {
  func.func @_gmn_kernel(%arg0: i32, %arg1: memref<2x4xf32, #tpu.memory_space<smem>>, %arg2: memref<5x4xf32, #tpu.memory_space<vmem>>, %arg3: memref<4x128xf32, #tpu.memory_space<vmem>>, %arg4: memref<1x5x128xf32, #tpu.memory_space<vmem>>, %arg5: memref<20x5xf32, #tpu.memory_space<vmem>>, %arg6: memref<20x5xf32, #tpu.memory_space<vmem>>, %arg7: memref<5x20xf32, #tpu.memory_space<vmem>>, %arg8: memref<20x128xf32, #tpu.memory_space<vmem>>, %arg9: memref<4x384x32xf32, #tpu.memory_space<vmem>>, %arg10: memref<4x1x32xf32, #tpu.memory_space<vmem>>, %arg11: memref<4x32x128xf32, #tpu.memory_space<vmem>>, %arg12: memref<4x1x128xf32, #tpu.memory_space<vmem>>, %arg13: memref<4x128x32xf32, #tpu.memory_space<vmem>>, %arg14: memref<4x1x32xf32, #tpu.memory_space<vmem>>, %arg15: memref<4x1x32xf32, #tpu.memory_space<vmem>>, %arg16: memref<4x1x1xf32, #tpu.memory_space<vmem>>, %arg17: memref<4x256x32xf32, #tpu.memory_space<vmem>>, %arg18: memref<4x1x32xf32, #tpu.memory_space<vmem>>, %arg19: memref<4x32x128xf32, #tpu.memory_space<vmem>>, %arg20: memref<4x1x128xf32, #tpu.memory_space<vmem>>, %arg21: memref<1x5x128xf32, #tpu.memory_space<vmem>>, %arg22: memref<2x5x128xf32, #tpu.memory_space<vmem>>, %arg23: memref<5x128xf32, #tpu.memory_space<vmem>>) attributes {dimension_semantics = [#tpu.dimension_semantics<arbitrary>], iteration_bounds = array<i64: 4>, scalar_prefetch = 0 : i64, scratch_operands = 1 : i64, tpu.core_type = #tpu.core_type<tc>, window_params = [{transform_indices = @transform_0, window_bounds = array<i64: 2, 4>}, {pipeline_mode = #tpu.pipeline_mode<synchronous>, transform_indices = @transform_1, window_bounds = array<i64: 5, 4>}, {pipeline_mode = #tpu.pipeline_mode<synchronous>, transform_indices = @transform_2, window_bounds = array<i64: 4, 128>}, {transform_indices = @transform_3, window_bounds = array<i64: 1, 5, 128>}, {pipeline_mode = #tpu.pipeline_mode<synchronous>, transform_indices = @transform_4, window_bounds = array<i64: 20, 5>}, {pipeline_mode = #tpu.pipeline_mode<synchronous>, transform_indices = @transform_5, window_bounds = array<i64: 20, 5>}, {pipeline_mode = #tpu.pipeline_mode<synchronous>, transform_indices = @transform_6, window_bounds = array<i64: 5, 20>}, {pipeline_mode = #tpu.pipeline_mode<synchronous>, transform_indices = @transform_7, window_bounds = array<i64: 20, 128>}, {pipeline_mode = #tpu.pipeline_mode<synchronous>, transform_indices = @transform_8, window_bounds = array<i64: 4, 384, 32>}, {pipeline_mode = #tpu.pipeline_mode<synchronous>, transform_indices = @transform_9, window_bounds = array<i64: 4, 1, 32>}, {pipeline_mode = #tpu.pipeline_mode<synchronous>, transform_indices = @transform_10, window_bounds = array<i64: 4, 32, 128>}, {pipeline_mode = #tpu.pipeline_mode<synchronous>, transform_indices = @transform_11, window_bounds = array<i64: 4, 1, 128>}, {pipeline_mode = #tpu.pipeline_mode<synchronous>, transform_indices = @transform_12, window_bounds = array<i64: 4, 128, 32>}, {pipeline_mode = #tpu.pipeline_mode<synchronous>, transform_indices = @transform_13, window_bounds = array<i64: 4, 1, 32>}, {pipeline_mode = #tpu.pipeline_mode<synchronous>, transform_indices = @transform_14, window_bounds = array<i64: 4, 1, 32>}, {pipeline_mode = #tpu.pipeline_mode<synchronous>, transform_indices = @transform_15, window_bounds = array<i64: 4, 1, 1>}, {pipeline_mode = #tpu.pipeline_mode<synchronous>, transform_indices = @transform_16, window_bounds = array<i64: 4, 256, 32>}, {pipeline_mode = #tpu.pipeline_mode<synchronous>, transform_indices = @transform_17, window_bounds = array<i64: 4, 1, 32>}, {pipeline_mode = #tpu.pipeline_mode<synchronous>, transform_indices = @transform_18, window_bounds = array<i64: 4, 32, 128>}, {pipeline_mode = #tpu.pipeline_mode<synchronous>, transform_indices = @transform_19, window_bounds = array<i64: 4, 1, 128>}, {transform_indices = @transform_20, window_bounds = array<i64: 1, 5, 128>}, {pipeline_mode = #tpu.pipeline_mode<synchronous>, transform_indices = @transform_21, window_bounds = array<i64: 2, 5, 128>}]} {
    %0 = tpu.iota {dimensions = array<i32: 1>} : vector<1x128xi32>
    %c32_i32 = arith.constant 32 : i32
    %1 = vector.broadcast %c32_i32 : i32 to vector<1x128xi32>
    %2 = arith.cmpi sge, %0, %1 : vector<1x128xi32>
    %c35_i32 = arith.constant 35 : i32
    %3 = vector.broadcast %c35_i32 : i32 to vector<1x128xi32>
    %4 = arith.cmpi slt, %0, %3 : vector<1x128xi32>
    %5 = arith.andi %2, %4 : vector<1x128xi1>
    %6 = arith.extui %5 : vector<1x128xi1> to vector<1x128xi32>
    %7 = arith.sitofp %6 : vector<1x128xi32> to vector<1x128xf32>
    %cst = arith.constant 3.000000e+00 : f32
    %8 = vector.broadcast %cst : f32 to vector<1x128xf32>
    %9 = arith.mulf %7, %8 : vector<1x128xf32>
    %c0_i32 = arith.constant 0 : i32
    %10 = vector.broadcast %c0_i32 : i32 to vector<1x128xi32>
    %11 = arith.cmpi eq, %0, %10 : vector<1x128xi32>
    %12 = arith.extui %11 : vector<1x128xi1> to vector<1x128xi32>
    %13 = arith.sitofp %12 : vector<1x128xi32> to vector<1x128xf32>
    %c0_i32_0 = arith.constant 0 : i32
    %14 = arith.cmpi eq, %arg0, %c0_i32_0 : i32
    %15 = arith.extui %14 : i1 to i32
    %c0_i32_1 = arith.constant 0 : i32
    %16 = arith.cmpi ne, %15, %c0_i32_1 : i32
    scf.if %16 {
      %c0_34 = arith.constant 0 : index
      %c0_35 = arith.constant 0 : index
      %53 = vector.load %arg2[%c0_34, %c0_35] : memref<5x4xf32, #tpu.memory_space<vmem>>, vector<5x4xf32>
      %c0_36 = arith.constant 0 : index
      %c0_37 = arith.constant 0 : index
      %54 = vector.load %arg3[%c0_36, %c0_37] : memref<4x128xf32, #tpu.memory_space<vmem>>, vector<4x128xf32>
      %cst_38 = arith.constant dense<0.000000e+00> : vector<5x128xf32>
      %55 = tpu.matmul %53, %54, %cst_38 {dimension_numbers = #tpu.dot_dimension_numbers<[1], [0], [0], [1], [0, 0, 1, 1], [], []>} : vector<5x4xf32>, vector<4x128xf32>, vector<5x128xf32> -> vector<5x128xf32>
      %c0_39 = arith.constant 0 : index
      %c0_40 = arith.constant 0 : index
      %56 = vector.load %arg23[%c0_39, %c0_40] : memref<5x128xf32, #tpu.memory_space<vmem>>, vector<5x128xf32>
      tpu.vector_store %arg23[%c0_39, %c0_40], %55 {strides = array<i32>} : memref<5x128xf32, #tpu.memory_space<vmem>>, vector<5x128xf32>,
    } else {
    }
    %c0 = arith.constant 0 : index
    %c0_2 = arith.constant 0 : index
    %17 = vector.load %arg23[%c0, %c0_2] : memref<5x128xf32, #tpu.memory_space<vmem>>, vector<5x128xf32>
    %c0_3 = arith.constant 0 : index
    %c0_4 = arith.constant 0 : index
    %c0_5 = arith.constant 0 : index
    %18 = vector.load %arg4[%c0_3, %c0_4, %c0_5] : memref<1x5x128xf32, #tpu.memory_space<vmem>>, vector<1x5x128xf32>
    %19 = vector.shape_cast %18 : vector<1x5x128xf32> to vector<5x128xf32>
    %20 = arith.addf %17, %19 : vector<5x128xf32>
    %c0_6 = arith.constant 0 : index
    %c0_7 = arith.constant 0 : index
    %21 = vector.load %arg5[%c0_6, %c0_7] : memref<20x5xf32, #tpu.memory_space<vmem>>, vector<20x5xf32>
    %c0_8 = arith.constant 0 : index
    %c0_9 = arith.constant 0 : index
    %22 = vector.load %arg6[%c0_8, %c0_9] : memref<20x5xf32, #tpu.memory_space<vmem>>, vector<20x5xf32>
    %c0_10 = arith.constant 0 : index
    %c0_11 = arith.constant 0 : index
    %23 = vector.load %arg7[%c0_10, %c0_11] : memref<5x20xf32, #tpu.memory_space<vmem>>, vector<5x20xf32>
    %c0_12 = arith.constant 0 : index
    %c0_13 = arith.constant 0 : index
    %24 = vector.load %arg8[%c0_12, %c0_13] : memref<20x128xf32, #tpu.memory_space<vmem>>, vector<20x128xf32>
    %c0_i32_14 = arith.constant 0 : i32
    %c4_i32 = arith.constant 4 : i32
    %25 = arith.addi %c0_i32_14, %c4_i32 : i32
    %c1_i32 = arith.constant 1 : i32
    %26 = scf.for %arg24 = %c0_i32_14 to %25 step %c1_i32 iter_args(%arg25 = %20) -> (vector<5x128xf32>)  : i32 {
      %cst_34 = arith.constant dense<0.000000e+00> : vector<20x128xf32>
      %53 = tpu.matmul %21, %arg25, %cst_34 {dimension_numbers = #tpu.dot_dimension_numbers<[1], [0], [0], [1], [0, 0, 1, 1], [], []>} : vector<20x5xf32>, vector<5x128xf32>, vector<20x128xf32> -> vector<20x128xf32>
      %cst_35 = arith.constant dense<0.000000e+00> : vector<20x128xf32>
      %54 = tpu.matmul %22, %arg25, %cst_35 {dimension_numbers = #tpu.dot_dimension_numbers<[1], [0], [0], [1], [0, 0, 1, 1], [], []>} : vector<20x5xf32>, vector<5x128xf32>, vector<20x128xf32> -> vector<20x128xf32>
      %55 = arith.subf %53, %54 : vector<20x128xf32>
      %56 = vector.broadcast %7 : vector<1x128xf32> to vector<20x128xf32>
      %57 = arith.mulf %55, %56 : vector<20x128xf32>
      %58 = arith.mulf %57, %57 : vector<20x128xf32>
      %cst_36 = arith.constant dense<0.000000e+00> : vector<20xf32>
      %59 = vector.multi_reduction <add>, %58, %cst_36 [1] : vector<20x128xf32> to vector<20xf32>
      %60 = vector.shape_cast %59 : vector<20xf32> to vector<20x1xf32>
      %61 = vector.broadcast %60 : vector<20x1xf32> to vector<20x128xf32>
      %62 = vector.broadcast %13 : vector<1x128xf32> to vector<20x128xf32>
      %63 = arith.mulf %61, %62 : vector<20x128xf32>
      %64 = arith.addf %24, %63 : vector<20x128xf32>
      %65 = tpu.concatenate %53, %54, %64 in 1 : vector<20x128xf32>, vector<20x128xf32>, vector<20x128xf32> -> vector<20x384xf32>
      %66 = arith.index_cast %arg24 : i32 to index
      %c0_37 = arith.constant 0 : index
      %c0_38 = arith.constant 0 : index
      %67 = vector.load %arg9[%66, %c0_37, %c0_38] : memref<4x384x32xf32, #tpu.memory_space<vmem>>, vector<1x384x32xf32>
      %68 = vector.shape_cast %67 : vector<1x384x32xf32> to vector<384x32xf32>
      %cst_39 = arith.constant dense<0.000000e+00> : vector<20x32xf32>
      %69 = tpu.matmul %65, %68, %cst_39 {dimension_numbers = #tpu.dot_dimension_numbers<[1], [0], [0], [1], [0, 0, 1, 1], [], []>} : vector<20x384xf32>, vector<384x32xf32>, vector<20x32xf32> -> vector<20x32xf32>
      %70 = arith.index_cast %arg24 : i32 to index
      %c0_40 = arith.constant 0 : index
      %c0_41 = arith.constant 0 : index
      %71 = vector.load %arg10[%70, %c0_40, %c0_41] : memref<4x1x32xf32, #tpu.memory_space<vmem>>, vector<1x1x32xf32>
      %72 = vector.shape_cast %71 : vector<1x1x32xf32> to vector<1x32xf32>
      %73 = vector.broadcast %72 : vector<1x32xf32> to vector<20x32xf32>
      %74 = arith.addf %69, %73 : vector<20x32xf32>
      %cst_42 = arith.constant 0.000000e+00 : f32
      %75 = vector.broadcast %cst_42 : f32 to vector<20x32xf32>
      %76 = arith.cmpf ogt, %74, %75 : vector<20x32xf32>
      %cst_43 = arith.constant 2.000000e-01 : f32
      %77 = vector.broadcast %cst_43 : f32 to vector<20x32xf32>
      %78 = arith.mulf %77, %74 : vector<20x32xf32>
      %79 = arith.select %76, %74, %78 : vector<20x32xi1>, vector<20x32xf32>
      %80 = arith.index_cast %arg24 : i32 to index
      %c0_44 = arith.constant 0 : index
      %c0_45 = arith.constant 0 : index
      %81 = vector.load %arg11[%80, %c0_44, %c0_45] : memref<4x32x128xf32, #tpu.memory_space<vmem>>, vector<1x32x128xf32>
      %82 = vector.shape_cast %81 : vector<1x32x128xf32> to vector<32x128xf32>
      %cst_46 = arith.constant dense<0.000000e+00> : vector<20x128xf32>
      %83 = tpu.matmul %79, %82, %cst_46 {dimension_numbers = #tpu.dot_dimension_numbers<[1], [0], [0], [1], [0, 0, 1, 1], [], []>} : vector<20x32xf32>, vector<32x128xf32>, vector<20x128xf32> -> vector<20x128xf32>
      %84 = arith.index_cast %arg24 : i32 to index
      %c0_47 = arith.constant 0 : index
      %c0_48 = arith.constant 0 : index
      %85 = vector.load %arg12[%84, %c0_47, %c0_48] : memref<4x1x128xf32, #tpu.memory_space<vmem>>, vector<1x1x128xf32>
      %86 = vector.shape_cast %85 : vector<1x1x128xf32> to vector<1x128xf32>
      %87 = vector.broadcast %86 : vector<1x128xf32> to vector<20x128xf32>
      %88 = arith.addf %83, %87 : vector<20x128xf32>
      %cst_49 = arith.constant 0.000000e+00 : f32
      %89 = vector.broadcast %cst_49 : f32 to vector<20x128xf32>
      %90 = arith.cmpf ogt, %88, %89 : vector<20x128xf32>
      %cst_50 = arith.constant 2.000000e-01 : f32
      %91 = vector.broadcast %cst_50 : f32 to vector<20x128xf32>
      %92 = arith.mulf %91, %88 : vector<20x128xf32>
      %93 = arith.select %90, %88, %92 : vector<20x128xi1>, vector<20x128xf32>
      %94 = arith.index_cast %arg24 : i32 to index
      %c0_51 = arith.constant 0 : index
      %c0_52 = arith.constant 0 : index
      %95 = vector.load %arg13[%94, %c0_51, %c0_52] : memref<4x128x32xf32, #tpu.memory_space<vmem>>, vector<1x128x32xf32>
      %96 = vector.shape_cast %95 : vector<1x128x32xf32> to vector<128x32xf32>
      %cst_53 = arith.constant dense<0.000000e+00> : vector<20x32xf32>
      %97 = tpu.matmul %93, %96, %cst_53 {dimension_numbers = #tpu.dot_dimension_numbers<[1], [0], [0], [1], [0, 0, 1, 1], [], []>} : vector<20x128xf32>, vector<128x32xf32>, vector<20x32xf32> -> vector<20x32xf32>
      %98 = arith.index_cast %arg24 : i32 to index
      %c0_54 = arith.constant 0 : index
      %c0_55 = arith.constant 0 : index
      %99 = vector.load %arg14[%98, %c0_54, %c0_55] : memref<4x1x32xf32, #tpu.memory_space<vmem>>, vector<1x1x32xf32>
      %100 = vector.shape_cast %99 : vector<1x1x32xf32> to vector<1x32xf32>
      %101 = vector.broadcast %100 : vector<1x32xf32> to vector<20x32xf32>
      %102 = arith.addf %97, %101 : vector<20x32xf32>
      %cst_56 = arith.constant 0.000000e+00 : f32
      %103 = vector.broadcast %cst_56 : f32 to vector<20x32xf32>
      %104 = arith.cmpf ogt, %102, %103 : vector<20x32xf32>
      %cst_57 = arith.constant 2.000000e-01 : f32
      %105 = vector.broadcast %cst_57 : f32 to vector<20x32xf32>
      %106 = arith.mulf %105, %102 : vector<20x32xf32>
      %107 = arith.select %104, %102, %106 : vector<20x32xi1>, vector<20x32xf32>
      %108 = arith.index_cast %arg24 : i32 to index
      %c0_58 = arith.constant 0 : index
      %c0_59 = arith.constant 0 : index
      %109 = vector.load %arg15[%108, %c0_58, %c0_59] : memref<4x1x32xf32, #tpu.memory_space<vmem>>, vector<1x1x32xf32>
      %110 = vector.shape_cast %109 : vector<1x1x32xf32> to vector<1x32xf32>
      %111 = vector.broadcast %110 : vector<1x32xf32> to vector<20x32xf32>
      %112 = arith.mulf %107, %111 : vector<20x32xf32>
      %cst_60 = arith.constant dense<0.000000e+00> : vector<20xf32>
      %113 = vector.multi_reduction <add>, %112, %cst_60 [1] : vector<20x32xf32> to vector<20xf32>
      %114 = vector.shape_cast %113 : vector<20xf32> to vector<20x1xf32>
      %115 = arith.index_cast %arg24 : i32 to index
      %c0_61 = arith.constant 0 : index
      %c0_62 = arith.constant 0 : index
      %116 = vector.load %arg16[%115, %c0_61, %c0_62] : memref<4x1x1xf32, #tpu.memory_space<vmem>>, vector<1x1x1xf32>
      %117 = vector.shape_cast %116 : vector<1x1x1xf32> to vector<1x1xf32>
      %118 = vector.broadcast %117 : vector<1x1xf32> to vector<20x1xf32>
      %119 = arith.addf %114, %118 : vector<20x1xf32>
      %120 = vector.broadcast %119 : vector<20x1xf32> to vector<20x128xf32>
      %121 = arith.mulf %57, %120 : vector<20x128xf32>
      %122 = arith.addf %93, %121 : vector<20x128xf32>
      %cst_63 = arith.constant dense<0.000000e+00> : vector<5x128xf32>
      %123 = tpu.matmul %23, %122, %cst_63 {dimension_numbers = #tpu.dot_dimension_numbers<[1], [0], [0], [1], [0, 0, 1, 1], [], []>} : vector<5x20xf32>, vector<20x128xf32>, vector<5x128xf32> -> vector<5x128xf32>
      %124 = tpu.concatenate %arg25, %123 in 1 : vector<5x128xf32>, vector<5x128xf32> -> vector<5x256xf32>
      %125 = arith.index_cast %arg24 : i32 to index
      %c0_64 = arith.constant 0 : index
      %c0_65 = arith.constant 0 : index
      %126 = vector.load %arg17[%125, %c0_64, %c0_65] : memref<4x256x32xf32, #tpu.memory_space<vmem>>, vector<1x256x32xf32>
      %127 = vector.shape_cast %126 : vector<1x256x32xf32> to vector<256x32xf32>
      %cst_66 = arith.constant dense<0.000000e+00> : vector<5x32xf32>
      %128 = tpu.matmul %124, %127, %cst_66 {dimension_numbers = #tpu.dot_dimension_numbers<[1], [0], [0], [1], [0, 0, 1, 1], [], []>} : vector<5x256xf32>, vector<256x32xf32>, vector<5x32xf32> -> vector<5x32xf32>
      %129 = arith.index_cast %arg24 : i32 to index
      %c0_67 = arith.constant 0 : index
      %c0_68 = arith.constant 0 : index
      %130 = vector.load %arg18[%129, %c0_67, %c0_68] : memref<4x1x32xf32, #tpu.memory_space<vmem>>, vector<1x1x32xf32>
      %131 = vector.shape_cast %130 : vector<1x1x32xf32> to vector<1x32xf32>
      %132 = vector.broadcast %131 : vector<1x32xf32> to vector<5x32xf32>
      %133 = arith.addf %128, %132 : vector<5x32xf32>
      %cst_69 = arith.constant 0.000000e+00 : f32
      %134 = vector.broadcast %cst_69 : f32 to vector<5x32xf32>
      %135 = arith.cmpf ogt, %133, %134 : vector<5x32xf32>
      %cst_70 = arith.constant 2.000000e-01 : f32
      %136 = vector.broadcast %cst_70 : f32 to vector<5x32xf32>
      %137 = arith.mulf %136, %133 : vector<5x32xf32>
      %138 = arith.select %135, %133, %137 : vector<5x32xi1>, vector<5x32xf32>
      %139 = arith.index_cast %arg24 : i32 to index
      %c0_71 = arith.constant 0 : index
      %c0_72 = arith.constant 0 : index
      %140 = vector.load %arg19[%139, %c0_71, %c0_72] : memref<4x32x128xf32, #tpu.memory_space<vmem>>, vector<1x32x128xf32>
      %141 = vector.shape_cast %140 : vector<1x32x128xf32> to vector<32x128xf32>
      %cst_73 = arith.constant dense<0.000000e+00> : vector<5x128xf32>
      %142 = tpu.matmul %138, %141, %cst_73 {dimension_numbers = #tpu.dot_dimension_numbers<[1], [0], [0], [1], [0, 0, 1, 1], [], []>} : vector<5x32xf32>, vector<32x128xf32>, vector<5x128xf32> -> vector<5x128xf32>
      %143 = arith.index_cast %arg24 : i32 to index
      %c0_74 = arith.constant 0 : index
      %c0_75 = arith.constant 0 : index
      %144 = vector.load %arg20[%143, %c0_74, %c0_75] : memref<4x1x128xf32, #tpu.memory_space<vmem>>, vector<1x1x128xf32>
      %145 = vector.shape_cast %144 : vector<1x1x128xf32> to vector<1x128xf32>
      %146 = vector.broadcast %145 : vector<1x128xf32> to vector<5x128xf32>
      %147 = arith.addf %142, %146 : vector<5x128xf32>
      %148 = arith.addf %arg25, %147 : vector<5x128xf32>
      %149 = vector.broadcast %9 : vector<1x128xf32> to vector<5x128xf32>
      %150 = arith.mulf %123, %149 : vector<5x128xf32>
      %151 = arith.addf %148, %150 : vector<5x128xf32>
      scf.yield %151 : vector<5x128xf32>
    }
    %c4_i32_15 = arith.constant 4 : i32
    %c0_16 = arith.constant 0 : index
    %c0_17 = arith.constant 0 : index
    %c0_18 = arith.constant 0 : index
    %27 = vector.load %arg21[%c0_16, %c0_17, %c0_18] : memref<1x5x128xf32, #tpu.memory_space<vmem>>, vector<1x5x128xf32>
    %28 = vector.shape_cast %27 : vector<1x5x128xf32> to vector<5x128xf32>
    %29 = vector.shape_cast %26 : vector<5x128xf32> to vector<1x5x128xf32>
    tpu.vector_store %arg21[%c0_16, %c0_17, %c0_18], %29 {strides = array<i32>} : memref<1x5x128xf32, #tpu.memory_space<vmem>>, vector<1x5x128xf32>,
    %c0_i32_19 = arith.constant 0 : i32
    %30 = arith.cmpi eq, %arg0, %c0_i32_19 : i32
    %31 = arith.extui %30 : i1 to i32
    %c0_i32_20 = arith.constant 0 : i32
    %32 = arith.cmpi ne, %31, %c0_i32_20 : i32
    scf.if %32 {
      %cst_34 = arith.constant 0.000000e+00 : f32
      %53 = vector.broadcast %cst_34 : f32 to vector<2x5x128xf32>
      %c0_35 = arith.constant 0 : index
      %c0_36 = arith.constant 0 : index
      %c0_37 = arith.constant 0 : index
      %54 = vector.load %arg22[%c0_35, %c0_36, %c0_37] : memref<2x5x128xf32, #tpu.memory_space<vmem>>, vector<2x5x128xf32>
      tpu.vector_store %arg22[%c0_35, %c0_36, %c0_37], %53 {strides = array<i32>} : memref<2x5x128xf32, #tpu.memory_space<vmem>>, vector<2x5x128xf32>,
    } else {
    }
    %c0_21 = arith.constant 0 : index
    %c0_22 = arith.constant 0 : index
    %c0_23 = arith.constant 0 : index
    %33 = vector.load %arg22[%c0_21, %c0_22, %c0_23] : memref<2x5x128xf32, #tpu.memory_space<vmem>>, vector<1x5x128xf32>
    %34 = vector.shape_cast %33 : vector<1x5x128xf32> to vector<5x128xf32>
    %c0_24 = arith.constant 0 : index
    %35 = arith.index_cast %arg0 : i32 to index
    %36 = memref.load %arg1[%c0_24, %35] : memref<2x4xf32, #tpu.memory_space<smem>>
    %37 = vector.broadcast %36 : f32 to vector<5x128xf32>
    %38 = arith.mulf %37, %26 : vector<5x128xf32>
    %39 = arith.addf %34, %38 : vector<5x128xf32>
    %c0_25 = arith.constant 0 : index
    %c0_26 = arith.constant 0 : index
    %c0_27 = arith.constant 0 : index
    %40 = vector.load %arg22[%c0_25, %c0_26, %c0_27] : memref<2x5x128xf32, #tpu.memory_space<vmem>>, vector<1x5x128xf32>
    %41 = vector.shape_cast %40 : vector<1x5x128xf32> to vector<5x128xf32>
    %42 = vector.shape_cast %39 : vector<5x128xf32> to vector<1x5x128xf32>
    tpu.vector_store %arg22[%c0_25, %c0_26, %c0_27], %42 {strides = array<i32>} : memref<2x5x128xf32, #tpu.memory_space<vmem>>, vector<1x5x128xf32>,
    %c1 = arith.constant 1 : index
    %c0_28 = arith.constant 0 : index
    %c0_29 = arith.constant 0 : index
    %43 = vector.load %arg22[%c1, %c0_28, %c0_29] : memref<2x5x128xf32, #tpu.memory_space<vmem>>, vector<1x5x128xf32>
    %44 = vector.shape_cast %43 : vector<1x5x128xf32> to vector<5x128xf32>
    %c1_30 = arith.constant 1 : index
    %45 = arith.index_cast %arg0 : i32 to index
    %46 = memref.load %arg1[%c1_30, %45] : memref<2x4xf32, #tpu.memory_space<smem>>
    %47 = vector.broadcast %46 : f32 to vector<5x128xf32>
    %48 = arith.mulf %47, %26 : vector<5x128xf32>
    %49 = arith.addf %44, %48 : vector<5x128xf32>
    %c1_31 = arith.constant 1 : index
    %c0_32 = arith.constant 0 : index
    %c0_33 = arith.constant 0 : index
    %50 = vector.load %arg22[%c1_31, %c0_32, %c0_33] : memref<2x5x128xf32, #tpu.memory_space<vmem>>, vector<1x5x128xf32>
    %51 = vector.shape_cast %50 : vector<1x5x128xf32> to vector<5x128xf32>
    %52 = vector.shape_cast %49 : vector<5x128xf32> to vector<1x5x128xf32>
    tpu.vector_store %arg22[%c1_31, %c0_32, %c0_33], %52 {strides = array<i32>} : memref<2x5x128xf32, #tpu.memory_space<vmem>>, vector<1x5x128xf32>,
    return
  }
  func.func @transform_0(%arg0: i32) -> (i32, i32) {
    %c0_i32 = arith.constant 0 : i32
    %c0_i32_0 = arith.constant 0 : i32
    %c0_i32_1 = arith.constant 0 : i32
    return %c0_i32, %c0_i32_0 : i32, i32
  }
  func.func @transform_1(%arg0: i32) -> (i32, i32) {
    %c0_i32 = arith.constant 0 : i32
    %c0_i32_0 = arith.constant 0 : i32
    %c0_i32_1 = arith.constant 0 : i32
    return %c0_i32, %c0_i32_0 : i32, i32
  }
  func.func @transform_2(%arg0: i32) -> (i32, i32) {
    %c0_i32 = arith.constant 0 : i32
    %c0_i32_0 = arith.constant 0 : i32
    %c0_i32_1 = arith.constant 0 : i32
    return %c0_i32, %c0_i32_0 : i32, i32
  }
  func.func @transform_3(%arg0: i32) -> (i32, i32, i32) {
    %c0_i32 = arith.constant 0 : i32
    %c0_i32_0 = arith.constant 0 : i32
    %c0_i32_1 = arith.constant 0 : i32
    return %arg0, %c0_i32, %c0_i32_0 : i32, i32, i32
  }
  func.func @transform_4(%arg0: i32) -> (i32, i32) {
    %c0_i32 = arith.constant 0 : i32
    %c0_i32_0 = arith.constant 0 : i32
    %c0_i32_1 = arith.constant 0 : i32
    return %c0_i32, %c0_i32_0 : i32, i32
  }
  func.func @transform_5(%arg0: i32) -> (i32, i32) {
    %c0_i32 = arith.constant 0 : i32
    %c0_i32_0 = arith.constant 0 : i32
    %c0_i32_1 = arith.constant 0 : i32
    return %c0_i32, %c0_i32_0 : i32, i32
  }
  func.func @transform_6(%arg0: i32) -> (i32, i32) {
    %c0_i32 = arith.constant 0 : i32
    %c0_i32_0 = arith.constant 0 : i32
    %c0_i32_1 = arith.constant 0 : i32
    return %c0_i32, %c0_i32_0 : i32, i32
  }
  func.func @transform_7(%arg0: i32) -> (i32, i32) {
    %c0_i32 = arith.constant 0 : i32
    %c0_i32_0 = arith.constant 0 : i32
    %c0_i32_1 = arith.constant 0 : i32
    return %c0_i32, %c0_i32_0 : i32, i32
  }
  func.func @transform_8(%arg0: i32) -> (i32, i32, i32) {
    %c0_i32 = arith.constant 0 : i32
    %c0_i32_0 = arith.constant 0 : i32
    %c0_i32_1 = arith.constant 0 : i32
    %c0_i32_2 = arith.constant 0 : i32
    return %c0_i32, %c0_i32_0, %c0_i32_1 : i32, i32, i32
  }
  func.func @transform_9(%arg0: i32) -> (i32, i32, i32) {
    %c0_i32 = arith.constant 0 : i32
    %c0_i32_0 = arith.constant 0 : i32
    %c0_i32_1 = arith.constant 0 : i32
    %c0_i32_2 = arith.constant 0 : i32
    return %c0_i32, %c0_i32_0, %c0_i32_1 : i32, i32, i32
  }
  func.func @transform_10(%arg0: i32) -> (i32, i32, i32) {
    %c0_i32 = arith.constant 0 : i32
    %c0_i32_0 = arith.constant 0 : i32
    %c0_i32_1 = arith.constant 0 : i32
    %c0_i32_2 = arith.constant 0 : i32
    return %c0_i32, %c0_i32_0, %c0_i32_1 : i32, i32, i32
  }
  func.func @transform_11(%arg0: i32) -> (i32, i32, i32) {
    %c0_i32 = arith.constant 0 : i32
    %c0_i32_0 = arith.constant 0 : i32
    %c0_i32_1 = arith.constant 0 : i32
    %c0_i32_2 = arith.constant 0 : i32
    return %c0_i32, %c0_i32_0, %c0_i32_1 : i32, i32, i32
  }
  func.func @transform_12(%arg0: i32) -> (i32, i32, i32) {
    %c0_i32 = arith.constant 0 : i32
    %c0_i32_0 = arith.constant 0 : i32
    %c0_i32_1 = arith.constant 0 : i32
    %c0_i32_2 = arith.constant 0 : i32
    return %c0_i32, %c0_i32_0, %c0_i32_1 : i32, i32, i32
  }
  func.func @transform_13(%arg0: i32) -> (i32, i32, i32) {
    %c0_i32 = arith.constant 0 : i32
    %c0_i32_0 = arith.constant 0 : i32
    %c0_i32_1 = arith.constant 0 : i32
    %c0_i32_2 = arith.constant 0 : i32
    return %c0_i32, %c0_i32_0, %c0_i32_1 : i32, i32, i32
  }
  func.func @transform_14(%arg0: i32) -> (i32, i32, i32) {
    %c0_i32 = arith.constant 0 : i32
    %c0_i32_0 = arith.constant 0 : i32
    %c0_i32_1 = arith.constant 0 : i32
    %c0_i32_2 = arith.constant 0 : i32
    return %c0_i32, %c0_i32_0, %c0_i32_1 : i32, i32, i32
  }
  func.func @transform_15(%arg0: i32) -> (i32, i32, i32) {
    %c0_i32 = arith.constant 0 : i32
    %c0_i32_0 = arith.constant 0 : i32
    %c0_i32_1 = arith.constant 0 : i32
    %c0_i32_2 = arith.constant 0 : i32
    return %c0_i32, %c0_i32_0, %c0_i32_1 : i32, i32, i32
  }
  func.func @transform_16(%arg0: i32) -> (i32, i32, i32) {
    %c0_i32 = arith.constant 0 : i32
    %c0_i32_0 = arith.constant 0 : i32
    %c0_i32_1 = arith.constant 0 : i32
    %c0_i32_2 = arith.constant 0 : i32
    return %c0_i32, %c0_i32_0, %c0_i32_1 : i32, i32, i32
  }
  func.func @transform_17(%arg0: i32) -> (i32, i32, i32) {
    %c0_i32 = arith.constant 0 : i32
    %c0_i32_0 = arith.constant 0 : i32
    %c0_i32_1 = arith.constant 0 : i32
    %c0_i32_2 = arith.constant 0 : i32
    return %c0_i32, %c0_i32_0, %c0_i32_1 : i32, i32, i32
  }
  func.func @transform_18(%arg0: i32) -> (i32, i32, i32) {
    %c0_i32 = arith.constant 0 : i32
    %c0_i32_0 = arith.constant 0 : i32
    %c0_i32_1 = arith.constant 0 : i32
    %c0_i32_2 = arith.constant 0 : i32
    return %c0_i32, %c0_i32_0, %c0_i32_1 : i32, i32, i32
  }
  func.func @transform_19(%arg0: i32) -> (i32, i32, i32) {
    %c0_i32 = arith.constant 0 : i32
    %c0_i32_0 = arith.constant 0 : i32
    %c0_i32_1 = arith.constant 0 : i32
    %c0_i32_2 = arith.constant 0 : i32
    return %c0_i32, %c0_i32_0, %c0_i32_1 : i32, i32, i32
  }
  func.func @transform_20(%arg0: i32) -> (i32, i32, i32) {
    %c0_i32 = arith.constant 0 : i32
    %c0_i32_0 = arith.constant 0 : i32
    %c0_i32_1 = arith.constant 0 : i32
    return %arg0, %c0_i32, %c0_i32_0 : i32, i32, i32
  }
  func.func @transform_21(%arg0: i32) -> (i32, i32, i32) {
    %c0_i32 = arith.constant 0 : i32
    %c0_i32_0 = arith.constant 0 : i32
    %c0_i32_1 = arith.constant 0 : i32
    %c0_i32_2 = arith.constant 0 : i32
    return %c0_i32, %c0_i32_0, %c0_i32_1 : i32, i32, i32
  }
}

</mosaic_0001>

<llo_original>
// kernel: gmn_forward.1
$region0: #{gmn_forward.1}
  #allocation0 [shape = 'u32[]', space=smem, size = 0x4, offset = 0x4, fixed_abs, tag = 'smem constant byte address 0x4 - core index']
  #allocation1 [shape = 'u32[144,128]{1,0:T(1,128)}', space=vmem, size = 0x12000, scoped, tag = 'internal scratch']
  #allocation2 [shape = 'f32[5,128]{1,0:T(8,128)}', space=vmem, size = 0x1000, scoped, tag = 'scratch operand']
  %s0 = inlined_call_operand.vmem [shape: f32[2,4], index: 0, kind: input, shape index: {}]
  %s1 = inlined_call_operand.vmem [shape: f32[5,4], index: 1, kind: input, shape index: {}]
  %s2 = inlined_call_operand.vmem [shape: f32[4,128], index: 2, kind: input, shape index: {}]
  %s3 = inlined_call_operand.vmem [shape: f32[4,5,128], index: 3, kind: input, shape index: {}]
  %s4 = inlined_call_operand.vmem [shape: f32[20,5], index: 4, kind: input, shape index: {}]
  %s5 = inlined_call_operand.vmem [shape: f32[20,5], index: 5, kind: input, shape index: {}]
  %s6 = inlined_call_operand.vmem [shape: f32[5,20], index: 6, kind: input, shape index: {}]
  %s7 = inlined_call_operand.vmem [shape: f32[20,128], index: 7, kind: input, shape index: {}]
  %s8 = inlined_call_operand.vmem [shape: f32[4,384,32], index: 8, kind: input, shape index: {}]
  %s9 = inlined_call_operand.vmem [shape: f32[4,1,32], index: 9, kind: input, shape index: {}]
  %s10 = inlined_call_operand.vmem [shape: f32[4,32,128], index: 10, kind: input, shape index: {}]
  %s11 = inlined_call_operand.vmem [shape: f32[4,1,128], index: 11, kind: input, shape index: {}]
  %s12 = inlined_call_operand.vmem [shape: f32[4,128,32], index: 12, kind: input, shape index: {}]
  %s13 = inlined_call_operand.vmem [shape: f32[4,1,32], index: 13, kind: input, shape index: {}]
  %s14 = inlined_call_operand.vmem [shape: f32[4,1,32], index: 14, kind: input, shape index: {}]
  %s15 = inlined_call_operand.vmem [shape: f32[4,1,1], index: 15, kind: input, shape index: {}]
  %s16 = inlined_call_operand.vmem [shape: f32[4,256,32], index: 16, kind: input, shape index: {}]
  %s17 = inlined_call_operand.vmem [shape: f32[4,1,32], index: 17, kind: input, shape index: {}]
  %s18 = inlined_call_operand.vmem [shape: f32[4,32,128], index: 18, kind: input, shape index: {}]
  %s19 = inlined_call_operand.vmem [shape: f32[4,1,128], index: 19, kind: input, shape index: {}]
  %s20 = inlined_call_operand.hbm [shape: f32[4,5,128], index: 20, kind: output, shape index: {0}]
  %s21 = inlined_call_operand.vmem [shape: f32[2,5,128], index: 21, kind: output, shape index: {1}]
  %22 = xla_tuple %s20, %s21
  %s23 = sld [smem:[#allocation0]]
  $region140: #{gmn_forward.1} parent=0
    _
  %s25 = ssub.s32 1, %s23
  %s26 = scalar_select 0, %s25, %s23
  $region1: #{gmn_forward.1} parent=0
    #allocation3 [shape = 'u8[1024]{0}', space=smem, size = 0x400, scoped, tag = 'input window, operand 0, single buffered']
    #allocation4 [shape = 's32[2]{0}', space=sflag, size = 0x8, scoped, tag = 'scoped memory for gmn_forward.1']
    #allocation5 [shape = 's32[2]{0}', space=sflag, size = 0x8, scoped, tag = 'scoped memory for gmn_forward.1']
    #allocation6 [shape = 'u8[8192]{0}', space=vmem, size = 0x2000, scoped, tag = 'output window, operand 0']
    %27 = vsyncpa [#allocation5], 0
    %28 = vsyncpa [#allocation4], 0
    %s29 = scalar_lea.sflag [#allocation4], 1
    %30 = vsyncpa %s29, 0
    loop: start=0, step=1, limit=6
    $region2: #{gmn_forward.1} parent=1 // loop_pre_header
      _
    $region3: #{gmn_forward.1} parent=1 // loop_header
      %s32 = sphi 0, %s36
      %p33 = scmp.ge.s32.totalorder %s32, 6
      %s40 = sphi 0, %s40
      %s42 = sphi 0, %s40
      %s43 = sphi 0, %s42
      %s57 = sphi 0, %s43
      %s61 = sphi 0, %s61
      %s63 = sphi 0, %s61
      %s64 = sphi 0, %s63
      %s78 = sphi 0, %s64
      %s82 = sphi 0, %s82
      %s84 = sphi 0, %s82
      %s85 = sphi 0, %s84
      %s99 = sphi 0, %s85
      %s105 = sphi 0, %s107
      %s108 = sphi 0, %s105
      %s109 = sphi 0, %s108
      %s125 = sphi 0, %s109
      %s129 = sphi 0, %s129
      %s131 = sphi 0, %s129
      %s132 = sphi 0, %s131
      %s146 = sphi 0, %s132
      %s150 = sphi 0, %s150
      %s152 = sphi 0, %s150
      %s153 = sphi 0, %s152
      %s167 = sphi 0, %s153
      %s171 = sphi 0, %s171
      %s173 = sphi 0, %s171
      %s174 = sphi 0, %s173
      %s188 = sphi 0, %s174
      %s192 = sphi 0, %s192
      %s194 = sphi 0, %s192
      %s195 = sphi 0, %s194
      %s209 = sphi 0, %s195
      %s213 = sphi 0, %s213
      %s215 = sphi 0, %s213
      %s216 = sphi 0, %s215
      %s230 = sphi 0, %s216
      %s234 = sphi 0, %s234
      %s236 = sphi 0, %s234
      %s237 = sphi 0, %s236
      %s251 = sphi 0, %s237
      %s255 = sphi 0, %s255
      %s257 = sphi 0, %s255
      %s258 = sphi 0, %s257
      %s272 = sphi 0, %s258
      %s276 = sphi 0, %s276
      %s278 = sphi 0, %s276
      %s279 = sphi 0, %s278
      %s293 = sphi 0, %s279
      %s297 = sphi 0, %s297
      %s299 = sphi 0, %s297
      %s300 = sphi 0, %s299
      %s314 = sphi 0, %s300
      %s318 = sphi 0, %s318
      %s320 = sphi 0, %s318
      %s321 = sphi 0, %s320
      %s335 = sphi 0, %s321
      %s339 = sphi 0, %s339
      %s341 = sphi 0, %s339
      %s342 = sphi 0, %s341
      %s356 = sphi 0, %s342
      %s360 = sphi 0, %s360
      %s362 = sphi 0, %s360
      %s363 = sphi 0, %s362
      %s377 = sphi 0, %s363
      %s381 = sphi 0, %s381
      %s383 = sphi 0, %s381
      %s384 = sphi 0, %s383
      %s398 = sphi 0, %s384
      %s402 = sphi 0, %s402
      %s404 = sphi 0, %s402
      %s405 = sphi 0, %s404
      %s419 = sphi 0, %s405
      %s423 = sphi 0, %s423
      %s425 = sphi 0, %s423
      %s426 = sphi 0, %s425
      %s440 = sphi 0, %s426
      %s444 = sphi 0, %s444
      %s446 = sphi 0, %s444
      %s447 = sphi 0, %s446
      %s461 = sphi 0, %s447
      %s467 = sphi 0, %s469
      %s470 = sphi 0, %s467
      %s471 = sphi 0, %s470
      %s487 = sphi 0, %s471
      %s491 = sphi 0, %s491
      %s493 = sphi 0, %s491
      %s494 = sphi 0, %s493
      %s508 = sphi 0, %s494
    $region4: #{gmn_forward.1} parent=1 // loop_header_branch
      %35 = sbr.rel (%p33) target = $region8
    $region5: #{gmn_forward.1} parent=1 // loop_body
      %s37 = ssub.s32 %s32, 1
      %s38 = ssub.s32 %s32, 2
      %s39 = sadd.s32 %s32, 1
      %s41 = sadd.s32 %s40, 1
      %p44 = scmp.eq.s32.totalorder %s32, 3
      %p45 = scmp.ne.s32.totalorder %s40, %s42
      %p46 = scmp.eq.s32.totalorder %s32, 0
      %p47 = por %p45, %p46
      %p48 = scmp.ne.s32.totalorder %s40, %s42
      %p49 = scmp.eq.s32.totalorder %s37, 3
      %p50 = por %p48, %p49
      %p51 = scmp.ne.s32.totalorder %s42, %s43
      %p52 = scmp.eq.s32.totalorder %s37, 0
      %p53 = por %p51, %p52
      %p54 = scmp.ne.s32.totalorder %s42, %s43
      %p55 = scmp.eq.s32.totalorder %s38, 3
      %p56 = por %p54, %p55
      %p58 = scmp.ne.s32.totalorder %s43, %s57
      %p59 = scmp.eq.s32.totalorder %s38, 0
      %p60 = por %p58, %p59
      %s62 = sadd.s32 %s61, 1
      %p65 = scmp.eq.s32.totalorder %s32, 3
      %p66 = scmp.ne.s32.totalorder %s61, %s63
      %p67 = scmp.eq.s32.totalorder %s32, 0
      %p68 = por %p66, %p67
      %p69 = scmp.ne.s32.totalorder %s61, %s63
      %p70 = scmp.eq.s32.totalorder %s37, 3
      %p71 = por %p69, %p70
      %p72 = scmp.ne.s32.totalorder %s63, %s64
      %p73 = scmp.eq.s32.totalorder %s37, 0
      %p74 = por %p72, %p73
      %p75 = scmp.ne.s32.totalorder %s63, %s64
      %p76 = scmp.eq.s32.totalorder %s38, 3
      %p77 = por %p75, %p76
      %p79 = scmp.ne.s32.totalorder %s64, %s78
      %p80 = scmp.eq.s32.totalorder %s38, 0
      %p81 = por %p79, %p80
      %s83 = sadd.s32 %s82, 1
      %p86 = scmp.eq.s32.totalorder %s32, 3
      %p87 = scmp.ne.s32.totalorder %s82, %s84
      %p88 = scmp.eq.s32.totalorder %s32, 0
      %p89 = por %p87, %p88
      %p90 = scmp.ne.s32.totalorder %s82, %s84
      %p91 = scmp.eq.s32.totalorder %s37, 3
      %p92 = por %p90, %p91
      %p93 = scmp.ne.s32.totalorder %s84, %s85
      %p94 = scmp.eq.s32.totalorder %s37, 0
      %p95 = por %p93, %p94
      %p96 = scmp.ne.s32.totalorder %s84, %s85
      %p97 = scmp.eq.s32.totalorder %s38, 3
      %p98 = por %p96, %p97
      %p100 = scmp.ne.s32.totalorder %s85, %s99
      %p101 = scmp.eq.s32.totalorder %s38, 0
      %p102 = por %p100, %p101
      %s103 = ssub.s32 %s32, %s39
      %p104 = scmp.eq.s32.totalorder %s103, 0
      %s106 = sadd.s32 %s105, 1
      %s107 = scalar_select %p104, %s105, %s106
      %p110 = pneg %p104
      %p111 = scmp.eq.s32.totalorder %s32, 3
      %p112 = por %p110, %p111
      %p113 = scmp.ne.s32.totalorder %s105, %s108
      %p114 = scmp.eq.s32.totalorder %s32, 0
      %p115 = por %p113, %p114
      %p116 = scmp.ne.s32.totalorder %s105, %s108
      %p117 = scmp.eq.s32.totalorder %s37, 3
      %p118 = por %p116, %p117
      %p119 = scmp.ne.s32.totalorder %s108, %s109
      %p120 = scmp.eq.s32.totalorder %s37, 0
      %p121 = por %p119, %p120
      %p122 = scmp.ne.s32.totalorder %s108, %s109
      %p123 = scmp.eq.s32.totalorder %s38, 3
      %p124 = por %p122, %p123
      %p126 = scmp.ne.s32.totalorder %s109, %s125
      %p127 = scmp.eq.s32.totalorder %s38, 0
      %p128 = por %p126, %p127
      %s130 = sadd.s32 %s129, 1
      %p133 = scmp.eq.s32.totalorder %s32, 3
      %p134 = scmp.ne.s32.totalorder %s129, %s131
      %p135 = scmp.eq.s32.totalorder %s32, 0
      %p136 = por %p134, %p135
      %p137 = scmp.ne.s32.totalorder %s129, %s131
      %p138 = scmp.eq.s32.totalorder %s37, 3
      %p139 = por %p137, %p138
      %p140 = scmp.ne.s32.totalorder %s131, %s132
      %p141 = scmp.eq.s32.totalorder %s37, 0
      %p142 = por %p140, %p141
      %p143 = scmp.ne.s32.totalorder %s131, %s132
      %p144 = scmp.eq.s32.totalorder %s38, 3
      %p145 = por %p143, %p144
      %p147 = scmp.ne.s32.totalorder %s132, %s146
      %p148 = scmp.eq.s32.totalorder %s38, 0
      %p149 = por %p147, %p148
      %s151 = sadd.s32 %s150, 1
      %p154 = scmp.eq.s32.totalorder %s32, 3
      %p155 = scmp.ne.s32.totalorder %s150, %s152
      %p156 = scmp.eq.s32.totalorder %s32, 0
      %p157 = por %p155, %p156
      %p158 = scmp.ne.s32.totalorder %s150, %s152
      %p159 = scmp.eq.s32.totalorder %s37, 3
      %p160 = por %p158, %p159
      %p161 = scmp.ne.s32.totalorder %s152, %s153
      %p162 = scmp.eq.s32.totalorder %s37, 0
      %p163 = por %p161, %p162
      %p164 = scmp.ne.s32.totalorder %s152, %s153
      %p165 = scmp.eq.s32.totalorder %s38, 3
      %p166 = por %p164, %p165
      %p168 = scmp.ne.s32.totalorder %s153, %s167
      %p169 = scmp.eq.s32.totalorder %s38, 0
      %p170 = por %p168, %p169
      %s172 = sadd.s32 %s171, 1
      %p175 = scmp.eq.s32.totalorder %s32, 3
      %p176 = scmp.ne.s32.totalorder %s171, %s173
      %p177 = scmp.eq.s32.totalorder %s32, 0
      %p178 = por %p176, %p177
      %p179 = scmp.ne.s32.totalorder %s171, %s173
      %p180 = scmp.eq.s32.totalorder %s37, 3
      %p181 = por %p179, %p180
      %p182 = scmp.ne.s32.totalorder %s173, %s174
      %p183 = scmp.eq.s32.totalorder %s37, 0
      %p184 = por %p182, %p183
      %p185 = scmp.ne.s32.totalorder %s173, %s174
      %p186 = scmp.eq.s32.totalorder %s38, 3
      %p187 = por %p185, %p186
      %p189 = scmp.ne.s32.totalorder %s174, %s188
      %p190 = scmp.eq.s32.totalorder %s38, 0
      %p191 = por %p189, %p190
      %s193 = sadd.s32 %s192, 1
      %p196 = scmp.eq.s32.totalorder %s32, 3
      %p197 = scmp.ne.s32.totalorder %s192, %s194
      %p198 = scmp.eq.s32.totalorder %s32, 0
      %p199 = por %p197, %p198
      %p200 = scmp.ne.s32.totalorder %s192, %s194
      %p201 = scmp.eq.s32.totalorder %s37, 3
      %p202 = por %p200, %p201
      %p203 = scmp.ne.s32.totalorder %s194, %s195
      %p204 = scmp.eq.s32.totalorder %s37, 0
      %p205 = por %p203, %p204
      %p206 = scmp.ne.s32.totalorder %s194, %s195
      %p207 = scmp.eq.s32.totalorder %s38, 3
      %p208 = por %p206, %p207
      %p210 = scmp.ne.s32.totalorder %s195, %s209
      %p211 = scmp.eq.s32.totalorder %s38, 0
      %p212 = por %p210, %p211
      %s214 = sadd.s32 %s213, 1
      %p217 = scmp.eq.s32.totalorder %s32, 3
      %p218 = scmp.ne.s32.totalorder %s213, %s215
      %p219 = scmp.eq.s32.totalorder %s32, 0
      %p220 = por %p218, %p219
      %p221 = scmp.ne.s32.totalorder %s213, %s215
      %p222 = scmp.eq.s32.totalorder %s37, 3
      %p223 = por %p221, %p222
      %p224 = scmp.ne.s32.totalorder %s215, %s216
      %p225 = scmp.eq.s32.totalorder %s37, 0
      %p226 = por %p224, %p225
      %p227 = scmp.ne.s32.totalorder %s215, %s216
      %p228 = scmp.eq.s32.totalorder %s38, 3
      %p229 = por %p227, %p228
      %p231 = scmp.ne.s32.totalorder %s216, %s230
      %p232 = scmp.eq.s32.totalorder %s38, 0
      %p233 = por %p231, %p232
      %s235 = sadd.s32 %s234, 1
      %p238 = scmp.eq.s32.totalorder %s32, 3
      %p239 = scmp.ne.s32.totalorder %s234, %s236
      %p240 = scmp.eq.s32.totalorder %s32, 0
      %p241 = por %p239, %p240
      %p242 = scmp.ne.s32.totalorder %s234, %s236
      %p243 = scmp.eq.s32.totalorder %s37, 3
      %p244 = por %p242, %p243
      %p245 = scmp.ne.s32.totalorder %s236, %s237
      %p246 = scmp.eq.s32.totalorder %s37, 0
      %p247 = por %p245, %p246
      %p248 = scmp.ne.s32.totalorder %s236, %s237
      %p249 = scmp.eq.s32.totalorder %s38, 3
      %p250 = por %p248, %p249
      %p252 = scmp.ne.s32.totalorder %s237, %s251
      %p253 = scmp.eq.s32.totalorder %s38, 0
      %p254 = por %p252, %p253
      %s256 = sadd.s32 %s255, 1
      %p259 = scmp.eq.s32.totalorder %s32, 3
      %p260 = scmp.ne.s32.totalorder %s255, %s257
      %p261 = scmp.eq.s32.totalorder %s32, 0
      %p262 = por %p260, %p261
      %p263 = scmp.ne.s32.totalorder %s255, %s257
      %p264 = scmp.eq.s32.totalorder %s37, 3
      %p265 = por %p263, %p264
      %p266 = scmp.ne.s32.totalorder %s257, %s258
      %p267 = scmp.eq.s32.totalorder %s37, 0
      %p268 = por %p266, %p267
      %p269 = scmp.ne.s32.totalorder %s257, %s258
      %p270 = scmp.eq.s32.totalorder %s38, 3
      %p271 = por %p269, %p270
      %p273 = scmp.ne.s32.totalorder %s258, %s272
      %p274 = scmp.eq.s32.totalorder %s38, 0
      %p275 = por %p273, %p274
      %s277 = sadd.s32 %s276, 1
      %p280 = scmp.eq.s32.totalorder %s32, 3
      %p281 = scmp.ne.s32.totalorder %s276, %s278
      %p282 = scmp.eq.s32.totalorder %s32, 0
      %p283 = por %p281, %p282
      %p284 = scmp.ne.s32.totalorder %s276, %s278
      %p285 = scmp.eq.s32.totalorder %s37, 3
      %p286 = por %p284, %p285
      %p287 = scmp.ne.s32.totalorder %s278, %s279
      %p288 = scmp.eq.s32.totalorder %s37, 0
      %p289 = por %p287, %p288
      %p290 = scmp.ne.s32.totalorder %s278, %s279
      %p291 = scmp.eq.s32.totalorder %s38, 3
      %p292 = por %p290, %p291
      %p294 = scmp.ne.s32.totalorder %s279, %s293
      %p295 = scmp.eq.s32.totalorder %s38, 0
      %p296 = por %p294, %p295
      %s298 = sadd.s32 %s297, 1
      %p301 = scmp.eq.s32.totalorder %s32, 3
      %p302 = scmp.ne.s32.totalorder %s297, %s299
      %p303 = scmp.eq.s32.totalorder %s32, 0
      %p304 = por %p302, %p303
      %p305 = scmp.ne.s32.totalorder %s297, %s299
      %p306 = scmp.eq.s32.totalorder %s37, 3
      %p307 = por %p305, %p306
      %p308 = scmp.ne.s32.totalorder %s299, %s300
      %p309 = scmp.eq.s32.totalorder %s37, 0
      %p310 = por %p308, %p309
      %p311 = scmp.ne.s32.totalorder %s299, %s300
      %p312 = scmp.eq.s32.totalorder %s38, 3
      %p313 = por %p311, %p312
      %p315 = scmp.ne.s32.totalorder %s300, %s314
      %p316 = scmp.eq.s32.totalorder %s38, 0
      %p317 = por %p315, %p316
      %s319 = sadd.s32 %s318, 1
      %p322 = scmp.eq.s32.totalorder %s32, 3
      %p323 = scmp.ne.s32.totalorder %s318, %s320
      %p324 = scmp.eq.s32.totalorder %s32, 0
      %p325 = por %p323, %p324
      %p326 = scmp.ne.s32.totalorder %s318, %s320
      %p327 = scmp.eq.s32.totalorder %s37, 3
      %p328 = por %p326, %p327
      %p329 = scmp.ne.s32.totalorder %s320, %s321
      %p330 = scmp.eq.s32.totalorder %s37, 0
      %p331 = por %p329, %p330
      %p332 = scmp.ne.s32.totalorder %s320, %s321
      %p333 = scmp.eq.s32.totalorder %s38, 3
      %p334 = por %p332, %p333
      %p336 = scmp.ne.s32.totalorder %s321, %s335
      %p337 = scmp.eq.s32.totalorder %s38, 0
      %p338 = por %p336, %p337
      %s340 = sadd.s32 %s339, 1
      %p343 = scmp.eq.s32.totalorder %s32, 3
      %p344 = scmp.ne.s32.totalorder %s339, %s341
      %p345 = scmp.eq.s32.totalorder %s32, 0
      %p346 = por %p344, %p345
      %p347 = scmp.ne.s32.totalorder %s339, %s341
      %p348 = scmp.eq.s32.totalorder %s37, 3
      %p349 = por %p347, %p348
      %p350 = scmp.ne.s32.totalorder %s341, %s342
      %p351 = scmp.eq.s32.totalorder %s37, 0
      %p352 = por %p350, %p351
      %p353 = scmp.ne.s32.totalorder %s341, %s342
      %p354 = scmp.eq.s32.totalorder %s38, 3
      %p355 = por %p353, %p354
      %p357 = scmp.ne.s32.totalorder %s342, %s356
      %p358 = scmp.eq.s32.totalorder %s38, 0
      %p359 = por %p357, %p358
      %s361 = sadd.s32 %s360, 1
      %p364 = scmp.eq.s32.totalorder %s32, 3
      %p365 = scmp.ne.s32.totalorder %s360, %s362
      %p366 = scmp.eq.s32.totalorder %s32, 0
      %p367 = por %p365, %p366
      %p368 = scmp.ne.s32.totalorder %s360, %s362
      %p369 = scmp.eq.s32.totalorder %s37, 3
      %p370 = por %p368, %p369
      %p371 = scmp.ne.s32.totalorder %s362, %s363
      %p372 = scmp.eq.s32.totalorder %s37, 0
      %p373 = por %p371, %p372
      %p374 = scmp.ne.s32.totalorder %s362, %s363
      %p375 = scmp.eq.s32.totalorder %s38, 3
      %p376 = por %p374, %p375
      %p378 = scmp.ne.s32.totalorder %s363, %s377
      %p379 = scmp.eq.s32.totalorder %s38, 0
      %p380 = por %p378, %p379
      %s382 = sadd.s32 %s381, 1
      %p385 = scmp.eq.s32.totalorder %s32, 3
      %p386 = scmp.ne.s32.totalorder %s381, %s383
      %p387 = scmp.eq.s32.totalorder %s32, 0
      %p388 = por %p386, %p387
      %p389 = scmp.ne.s32.totalorder %s381, %s383
      %p390 = scmp.eq.s32.totalorder %s37, 3
      %p391 = por %p389, %p390
      %p392 = scmp.ne.s32.totalorder %s383, %s384
      %p393 = scmp.eq.s32.totalorder %s37, 0
      %p394 = por %p392, %p393
      %p395 = scmp.ne.s32.totalorder %s383, %s384
      %p396 = scmp.eq.s32.totalorder %s38, 3
      %p397 = por %p395, %p396
      %p399 = scmp.ne.s32.totalorder %s384, %s398
      %p400 = scmp.eq.s32.totalorder %s38, 0
      %p401 = por %p399, %p400
      %s403 = sadd.s32 %s402, 1
      %p406 = scmp.eq.s32.totalorder %s32, 3
      %p407 = scmp.ne.s32.totalorder %s402, %s404
      %p408 = scmp.eq.s32.totalorder %s32, 0
      %p409 = por %p407, %p408
      %p410 = scmp.ne.s32.totalorder %s402, %s404
      %p411 = scmp.eq.s32.totalorder %s37, 3
      %p412 = por %p410, %p411
      %p413 = scmp.ne.s32.totalorder %s404, %s405
      %p414 = scmp.eq.s32.totalorder %s37, 0
      %p415 = por %p413, %p414
      %p416 = scmp.ne.s32.totalorder %s404, %s405
      %p417 = scmp.eq.s32.totalorder %s38, 3
      %p418 = por %p416, %p417
      %p420 = scmp.ne.s32.totalorder %s405, %s419
      %p421 = scmp.eq.s32.totalorder %s38, 0
      %p422 = por %p420, %p421
      %s424 = sadd.s32 %s423, 1
      %p427 = scmp.eq.s32.totalorder %s32, 3
      %p428 = scmp.ne.s32.totalorder %s423, %s425
      %p429 = scmp.eq.s32.totalorder %s32, 0
      %p430 = por %p428, %p429
      %p431 = scmp.ne.s32.totalorder %s423, %s425
      %p432 = scmp.eq.s32.totalorder %s37, 3
      %p433 = por %p431, %p432
      %p434 = scmp.ne.s32.totalorder %s425, %s426
      %p435 = scmp.eq.s32.totalorder %s37, 0
      %p436 = por %p434, %p435
      %p437 = scmp.ne.s32.totalorder %s425, %s426
      %p438 = scmp.eq.s32.totalorder %s38, 3
      %p439 = por %p437, %p438
      %p441 = scmp.ne.s32.totalorder %s426, %s440
      %p442 = scmp.eq.s32.totalorder %s38, 0
      %p443 = por %p441, %p442
      %s445 = sadd.s32 %s444, 1
      %p448 = scmp.eq.s32.totalorder %s32, 3
      %p449 = scmp.ne.s32.totalorder %s444, %s446
      %p450 = scmp.eq.s32.totalorder %s32, 0
      %p451 = por %p449, %p450
      %p452 = scmp.ne.s32.totalorder %s444, %s446
      %p453 = scmp.eq.s32.totalorder %s37, 3
      %p454 = por %p452, %p453
      %p455 = scmp.ne.s32.totalorder %s446, %s447
      %p456 = scmp.eq.s32.totalorder %s37, 0
      %p457 = por %p455, %p456
      %p458 = scmp.ne.s32.totalorder %s446, %s447
      %p459 = scmp.eq.s32.totalorder %s38, 3
      %p460 = por %p458, %p459
      %p462 = scmp.ne.s32.totalorder %s447, %s461
      %p463 = scmp.eq.s32.totalorder %s38, 0
      %p464 = por %p462, %p463
      %s465 = ssub.s32 %s32, %s39
      %p466 = scmp.eq.s32.totalorder %s465, 0
      %s468 = sadd.s32 %s467, 1
      %s469 = scalar_select %p466, %s467, %s468
      %p472 = pneg %p466
      %p473 = scmp.eq.s32.totalorder %s32, 3
      %p474 = por %p472, %p473
      %p475 = scmp.ne.s32.totalorder %s467, %s470
      %p476 = scmp.eq.s32.totalorder %s32, 0
      %p477 = por %p475, %p476
      %p478 = scmp.ne.s32.totalorder %s467, %s470
      %p479 = scmp.eq.s32.totalorder %s37, 3
      %p480 = por %p478, %p479
      %p481 = scmp.ne.s32.totalorder %s470, %s471
      %p482 = scmp.eq.s32.totalorder %s37, 0
      %p483 = por %p481, %p482
      %p484 = scmp.ne.s32.totalorder %s470, %s471
      %p485 = scmp.eq.s32.totalorder %s38, 3
      %p486 = por %p484, %p485
      %p488 = scmp.ne.s32.totalorder %s471, %s487
      %p489 = scmp.eq.s32.totalorder %s38, 0
      %p490 = por %p488, %p489
      %s492 = sadd.s32 %s491, 1
      %p495 = scmp.eq.s32.totalorder %s32, 3
      %p496 = scmp.ne.s32.totalorder %s491, %s493
      %p497 = scmp.eq.s32.totalorder %s32, 0
      %p498 = por %p496, %p497
      %p499 = scmp.ne.s32.totalorder %s491, %s493
      %p500 = scmp.eq.s32.totalorder %s37, 3
      %p501 = por %p499, %p500
      %p502 = scmp.ne.s32.totalorder %s493, %s494
      %p503 = scmp.eq.s32.totalorder %s37, 0
      %p504 = por %p502, %p503
      %p505 = scmp.ne.s32.totalorder %s493, %s494
      %p506 = scmp.eq.s32.totalorder %s38, 3
      %p507 = por %p505, %p506
      %p509 = scmp.ne.s32.totalorder %s494, %s508
      %p510 = scmp.eq.s32.totalorder %s38, 0
      %p511 = por %p509, %p510
      %p512 = scmp.le.s32.totalorder 1, %s32
      %p513 = scmp.lt.s32.totalorder %s32, 5
      %p514 = pnand %p512, %p513
      %p515 = pneg %p514
      // Predicated region
      $region9: #{gmn_forward.1} parent=5 // pred_check
        _
      $region10: #{gmn_forward.1} parent=5 // pred_check_branch
        %517 = sbr.rel (%p514) target = $region12
      $region11: #{gmn_forward.1} parent=5 // pred_region
        %s518 = ssub.s32 %s32, 1
        // Predicated region
        $region13: #{gmn_forward.1} parent=11 // pred_check
          %p519 = pneg %p53
        $region14: #{gmn_forward.1} parent=11 // pred_check_branch
          %521 = sbr.rel (%p519) target = $region16
        $region15: #{gmn_forward.1} parent=11 // pred_region
          %s523 = ssub.s32 32, 32
          %524 = vsyncadd [#allocation5], %s523
          %s526 = sshll.u32 %s0, 4
          %s527 = int_to_ptr.vmem [resolvable:$true] %s526
          %529 = dma.vmem_to_smem %s527, 32, [#allocation3], [#allocation5]
        $region16: #{gmn_forward.1} parent=11 // pred_fallthru
          _
        // Predicated region
        $region17: #{gmn_forward.1} parent=11 // pred_check
          %p530 = pneg %p74
        $region18: #{gmn_forward.1} parent=11 // pred_check_branch
          %532 = sbr.rel (%p530) target = $region20
        $region19: #{gmn_forward.1} parent=11 // pred_region
          _
        $region20: #{gmn_forward.1} parent=11 // pred_fallthru
          _
        // Predicated region
        $region21: #{gmn_forward.1} parent=11 // pred_check
          %p533 = pneg %p95
        $region22: #{gmn_forward.1} parent=11 // pred_check_branch
          %535 = sbr.rel (%p533) target = $region24
        $region23: #{gmn_forward.1} parent=11 // pred_region
          _
        $region24: #{gmn_forward.1} parent=11 // pred_fallthru
          _
        // Predicated region
        $region25: #{gmn_forward.1} parent=11 // pred_check
          %p536 = pneg %p142
        $region26: #{gmn_forward.1} parent=11 // pred_check_branch
          %538 = sbr.rel (%p536) target = $region28
        $region27: #{gmn_forward.1} parent=11 // pred_region
          _
        $region28: #{gmn_forward.1} parent=11 // pred_fallthru
          _
        // Predicated region
        $region29: #{gmn_forward.1} parent=11 // pred_check
          %p539 = pneg %p163
        $region30: #{gmn_forward.1} parent=11 // pred_check_branch
          %541 = sbr.rel (%p539) target = $region32
        $region31: #{gmn_forward.1} parent=11 // pred_region
          _
        $region32: #{gmn_forward.1} parent=11 // pred_fallthru
          _
        // Predicated region
        $region33: #{gmn_forward.1} parent=11 // pred_check
          %p542 = pneg %p184
        $region34: #{gmn_forward.1} parent=11 // pred_check_branch
          %544 = sbr.rel (%p542) target = $region36
        $region35: #{gmn_forward.1} parent=11 // pred_region
          _
        $region36: #{gmn_forward.1} parent=11 // pred_fallthru
          _
        // Predicated region
        $region37: #{gmn_forward.1} parent=11 // pred_check
          %p545 = pneg %p205
        $region38: #{gmn_forward.1} parent=11 // pred_check_branch
          %547 = sbr.rel (%p545) target = $region40
        $region39: #{gmn_forward.1} parent=11 // pred_region
          _
        $region40: #{gmn_forward.1} parent=11 // pred_fallthru
          _
        // Predicated region
        $region41: #{gmn_forward.1} parent=11 // pred_check
          %p548 = pneg %p226
        $region42: #{gmn_forward.1} parent=11 // pred_check_branch
          %550 = sbr.rel (%p548) target = $region44
        $region43: #{gmn_forward.1} parent=11 // pred_region
          _
        $region44: #{gmn_forward.1} parent=11 // pred_fallthru
          _
        // Predicated region
        $region45: #{gmn_forward.1} parent=11 // pred_check
          %p551 = pneg %p247
        $region46: #{gmn_forward.1} parent=11 // pred_check_branch
          %553 = sbr.rel (%p551) target = $region48
        $region47: #{gmn_forward.1} parent=11 // pred_region
          _
        $region48: #{gmn_forward.1} parent=11 // pred_fallthru
          _
        // Predicated region
        $region49: #{gmn_forward.1} parent=11 // pred_check
          %p554 = pneg %p268
        $region50: #{gmn_forward.1} parent=11 // pred_check_branch
          %556 = sbr.rel (%p554) target = $region52
        $region51: #{gmn_forward.1} parent=11 // pred_region
          _
        $region52: #{gmn_forward.1} parent=11 // pred_fallthru
          _
        // Predicated region
        $region53: #{gmn_forward.1} parent=11 // pred_check
          %p557 = pneg %p289
        $region54: #{gmn_forward.1} parent=11 // pred_check_branch
          %559 = sbr.rel (%p557) target = $region56
        $region55: #{gmn_forward.1} parent=11 // pred_region
          _
        $region56: #{gmn_forward.1} parent=11 // pred_fallthru
          _
        // Predicated region
        $region57: #{gmn_forward.1} parent=11 // pred_check
          %p560 = pneg %p310
        $region58: #{gmn_forward.1} parent=11 // pred_check_branch
          %562 = sbr.rel (%p560) target = $region60
        $region59: #{gmn_forward.1} parent=11 // pred_region
          _
        $region60: #{gmn_forward.1} parent=11 // pred_fallthru
          _
        // Predicated region
        $region61: #{gmn_forward.1} parent=11 // pred_check
          %p563 = pneg %p331
        $region62: #{gmn_forward.1} parent=11 // pred_check_branch
          %565 = sbr.rel (%p563) target = $region64
        $region63: #{gmn_forward.1} parent=11 // pred_region
          _
        $region64: #{gmn_forward.1} parent=11 // pred_fallthru
          _
        // Predicated region
        $region65: #{gmn_forward.1} parent=11 // pred_check
          %p566 = pneg %p352
        $region66: #{gmn_forward.1} parent=11 // pred_check_branch
          %568 = sbr.rel (%p566) target = $region68
        $region67: #{gmn_forward.1} parent=11 // pred_region
          _
        $region68: #{gmn_forward.1} parent=11 // pred_fallthru
          _
        // Predicated region
        $region69: #{gmn_forward.1} parent=11 // pred_check
          %p569 = pneg %p373
        $region70: #{gmn_forward.1} parent=11 // pred_check_branch
          %571 = sbr.rel (%p569) target = $region72
        $region71: #{gmn_forward.1} parent=11 // pred_region
          _
        $region72: #{gmn_forward.1} parent=11 // pred_fallthru
          _
        // Predicated region
        $region73: #{gmn_forward.1} parent=11 // pred_check
          %p572 = pneg %p394
        $region74: #{gmn_forward.1} parent=11 // pred_check_branch
          %574 = sbr.rel (%p572) target = $region76
        $region75: #{gmn_forward.1} parent=11 // pred_region
          _
        $region76: #{gmn_forward.1} parent=11 // pred_fallthru
          _
        // Predicated region
        $region77: #{gmn_forward.1} parent=11 // pred_check
          %p575 = pneg %p415
        $region78: #{gmn_forward.1} parent=11 // pred_check_branch
          %577 = sbr.rel (%p575) target = $region80
        $region79: #{gmn_forward.1} parent=11 // pred_region
          _
        $region80: #{gmn_forward.1} parent=11 // pred_fallthru
          _
        // Predicated region
        $region81: #{gmn_forward.1} parent=11 // pred_check
          %p578 = pneg %p436
        $region82: #{gmn_forward.1} parent=11 // pred_check_branch
          %580 = sbr.rel (%p578) target = $region84
        $region83: #{gmn_forward.1} parent=11 // pred_region
          _
        $region84: #{gmn_forward.1} parent=11 // pred_fallthru
          _
        // Predicated region
        $region85: #{gmn_forward.1} parent=11 // pred_check
          %p581 = pneg %p457
        $region86: #{gmn_forward.1} parent=11 // pred_check_branch
          %583 = sbr.rel (%p581) target = $region88
        $region87: #{gmn_forward.1} parent=11 // pred_region
          _
        $region88: #{gmn_forward.1} parent=11 // pred_fallthru
          _
      $region12: #{gmn_forward.1} parent=5 // pred_fallthru
        _
      %p584 = scmp.lt.s32.totalorder %s32, 4
      // Predicated region
      $region89: #{gmn_forward.1} parent=5 // pred_check
        %p585 = pneg %p584
      $region90: #{gmn_forward.1} parent=5 // pred_check_branch
        %587 = sbr.rel (%p585) target = $region92
      $region91: #{gmn_forward.1} parent=5 // pred_region
        // Predicated region
        $region93: #{gmn_forward.1} parent=91 // pred_check
          %p588 = pneg %p115
        $region94: #{gmn_forward.1} parent=91 // pred_check_branch
          %590 = sbr.rel (%p588) target = $region96
        $region95: #{gmn_forward.1} parent=91 // pred_region
          %p591 = scmp.lt.s32.totalorder %s32, 3
          %s592 = scalar_select %p591, %s32, 3
          %s593 = smul.addr %s592, 8
          %s594 = scalar_lea.vmem %s3, %s593
        $region96: #{gmn_forward.1} parent=91 // pred_fallthru
          _
      $region92: #{gmn_forward.1} parent=5 // pred_fallthru
        _
      %p595 = scmp.le.s32.totalorder 1, %s32
      %p596 = scmp.lt.s32.totalorder %s32, 5
      %p597 = pnand %p595, %p596
      %p598 = pneg %p597
      // Predicated region
      $region97: #{gmn_forward.1} parent=5 // pred_check
        _
      $region98: #{gmn_forward.1} parent=5 // pred_check_branch
        %600 = sbr.rel (%p597) target = $region100
      $region99: #{gmn_forward.1} parent=5 // pred_region
        %s601 = ssub.s32 %s32, 1
        // Predicated region
        $region101: #{gmn_forward.1} parent=99 // pred_check
          %p602 = pneg %p53
        $region102: #{gmn_forward.1} parent=99 // pred_check_branch
          %604 = sbr.rel (%p602) target = $region104
        $region103: #{gmn_forward.1} parent=99 // pred_region
          %605 = dma.done [#allocation5], 32
        $region104: #{gmn_forward.1} parent=99 // pred_fallthru
          _
        %606 = sfence
        %p607 = pneg %p53
        %p608 = pneg %p50
        %p609 = pneg %p74
        %p610 = pneg %p71
        %p611 = pneg %p95
        %p612 = pneg %p92
        %p613 = scmp.lt.s32.totalorder %s37, 3
        %s614 = scalar_select %p613, %s37, 3
        %s615 = smul.addr %s614, 8
        %s616 = scalar_lea.vmem %s3, %s615
        %p617 = pneg %p121
        %p618 = pneg %p118
        %p619 = pneg %p142
        %p620 = pneg %p139
        %p621 = pneg %p163
        %p622 = pneg %p160
        %p623 = pneg %p184
        %p624 = pneg %p181
        %p625 = pneg %p205
        %p626 = pneg %p202
        %p627 = pneg %p226
        %p628 = pneg %p223
        %p629 = pneg %p247
        %p630 = pneg %p244
        %p631 = pneg %p268
        %p632 = pneg %p265
        %p633 = pneg %p289
        %p634 = pneg %p286
        %p635 = pneg %p310
        %p636 = pneg %p307
        %p637 = pneg %p331
        %p638 = pneg %p328
        %p639 = pneg %p352
        %p640 = pneg %p349
        %p641 = pneg %p373
        %p642 = pneg %p370
        %p643 = pneg %p394
        %p644 = pneg %p391
        %p645 = pneg %p415
        %p646 = pneg %p412
        %p647 = pneg %p436
        %p648 = pneg %p433
        %p649 = pneg %p457
        %p650 = pneg %p454
        %p651 = pneg %p483
        %p652 = pneg %p480
        %s653 = sand.u32 %s470, 1
        %s654 = scalar_lea.sflag [#allocation4], %s653
        %s655 = sand.u32 %s470, 1
        %s656 = smul.addr %s655, 8
        %s657 = scalar_lea.vmem [#allocation6], %s656
        %p658 = pneg %p504
        %p659 = pneg %p501
        %p660 = scmp.lt.s32.totalorder %s37, 3
        %s661 = scalar_select %p660, %s37, 3
        %s662 = smul.addr %s661, 8
        %s663 = scalar_lea.vmem %s3, %s662
        %v664 = vlaneseq
        %v665 = vand.u32 %v664, 127
        %vm666 = vcmp.ge.s32.totalorder %v665, 32
        %vm667 = vcmp.lt.s32.totalorder %v665, 35
        %vm668 = vmand %vm666, %vm667
        %v669 = vsel %vm668, 1, 0
        %v670 = vcvt.s32.f32 %v669
        %v671 = vmul.f32 %v670, 3.0
        %vm672 = vcmp.eq.s32.totalorder %v665, 0
        %v673 = vsel %vm672, 1, 0
        %v674 = vcvt.s32.f32 %v673
        %p675 = scmp.eq.s32.totalorder %s37, 0
        // Predicated region
        $region105: #{gmn_forward.1} parent=99 // pred_check
          %p676 = pneg %p675
        $region106: #{gmn_forward.1} parent=99 // pred_check_branch
          %678 = sbr.rel (%p676) target = $region108
        $region107: #{gmn_forward.1} parent=99 // pred_region
          %v679 = vld [vmem:[%s1] sm:$0x1f]
          %v680 = vld [vmem:[%s2] sm:$0xf]
          %vm681 = vcmask 31744
          %v683 = vsel %vm681, %v679, 0
          %vm685 = vcmask 1043456
          %v687 = vsel %vm685, %v680, 0
          %689 = vmatprep.subr.mxu0 0.0
          %690 = vmatpush1.msra.mxu0 0.0
          %691 = vmatprep.subr.mxu0 0.0
          %692 = vmatpush1.msra.mxu0 0.0
          %693 = vmatprep.subr.mxu0 0.0
          %694 = vmatpush1.msra.mxu0 0.0
          %695 = vmatprep.subr.mxu0 0.0
          %696 = vmatpush1.msra.mxu0 0.0
          %697 = vmatprep.subr.mxu0 0.0
          %698 = vmatpush1.msra.mxu0 0.0
          %699 = vmatprep.subr.mxu0 0.0
          %700 = vmatpush1.msra.mxu0 0.0
          %701 = vmatprep.subr.mxu0 0.0
          %702 = vmatpush1.msra.mxu0 0.0
          %703 = vmatprep.subr.mxu0 0.0
          %704 = vmatpush1.msra.mxu0 0.0
          %705 = vmatprep.subr.mxu0 0.0
          %706 = vmatpush1.msra.mxu0 0.0
          %707 = vmatprep.subr.mxu0 0.0
          %708 = vmatpush1.msra.mxu0 0.0
          %709 = vmatprep.subr.mxu0 0.0
          %710 = vmatpush1.msra.mxu0 0.0
          %711 = vmatprep.subr.mxu0 0.0
          %712 = vmatpush1.msra.mxu0 0.0
          %713 = vmatprep.subr.mxu0 0.0
          %714 = vmatpush1.msra.mxu0 0.0
          %715 = vmatprep.subr.mxu0 0.0
          %716 = vmatpush1.msra.mxu0 0.0
          %717 = vmatprep.subr.mxu0 0.0
          %718 = vmatpush1.msra.mxu0 0.0
          %719 = vmatprep.subr.mxu0 0.0
          %720 = vmatpush1.msra.mxu0 %v687
          %721 = vmatprep.subr.mxu0 0.0
          %722 = vmatpush2.msra.mxu0 0.0
          %723 = vmatprep.subr.mxu0 0.0
          %724 = vmatpush2.msra.mxu0 0.0
          %725 = vmatprep.subr.mxu0 0.0
          %726 = vmatpush2.msra.mxu0 0.0
          %727 = vmatprep.subr.mxu0 0.0
          %728 = vmatpush2.msra.mxu0 0.0
          %729 = vmatprep.subr.mxu0 0.0
          %730 = vmatpush2.msra.mxu0 0.0
          %731 = vmatprep.subr.mxu0 0.0
          %732 = vmatpush2.msra.mxu0 0.0
          %733 = vmatprep.subr.mxu0 0.0
          %734 = vmatpush2.msra.mxu0 0.0
          %735 = vmatprep.subr.mxu0 0.0
          %736 = vmatpush2.msra.mxu0 0.0
          %737 = vmatprep.subr.mxu0 0.0
          %738 = vmatpush2.msra.mxu0 0.0
          %739 = vmatprep.subr.mxu0 0.0
          %740 = vmatpush2.msra.mxu0 0.0
          %741 = vmatprep.subr.mxu0 0.0
          %742 = vmatpush2.msra.mxu0 0.0
          %743 = vmatprep.subr.mxu0 0.0
          %744 = vmatpush2.msra.mxu0 0.0
          %745 = vmatprep.subr.mxu0 0.0
          %746 = vmatpush2.msra.mxu0 0.0
          %747 = vmatprep.subr.mxu0 0.0
          %748 = vmatpush2.msra.mxu0 0.0
          %749 = vmatprep.subr.mxu0 0.0
          %750 = vmatpush2.msra.mxu0 0.0
          %751 = vmatprep.subr.mxu0 0.0
          %752 = vmatpush2.msra.mxu0 0.0
          %753 = vmatprep.mubr.f32.mxu0 0.0
          %754 = vmatmul.mubr.f32.gmra.mxu0 %v683
          %v755 = vpop.f32.mrf.mxu0
          %v756 = vadd.f32 0.0, %v755
          %v757 = vpop.f32.mrf.mxu0
          %758 = vdwg.mxu0
          %759 = vst [vmem:[#allocation2] sm:$0x1f] %v756
        $region108: #{gmn_forward.1} parent=99 // pred_fallthru
          _
        %v760 = vld [vmem:[#allocation2] sm:$0x1f]
        %v761 = vld [vmem:[%s663] sm:$0x1f]
        %v762 = vadd.f32 %v760, %v761
        %v763 = vld [vmem:[%s4] sm:$0xff]
        %v764 = vld [vmem:[%s4 + $0x8] sm:$0xff]
        %v765 = vld [vmem:[%s4 + $0x10] sm:$0xf]
        %v766 = vld [vmem:[%s5] sm:$0xff]
        %v767 = vld [vmem:[%s5 + $0x8] sm:$0xff]
        %v768 = vld [vmem:[%s5 + $0x10] sm:$0xf]
        %v769 = vld [vmem:[%s6] sm:$0x1f]
        %v770 = vld [vmem:[%s7] sm:$0xff]
        %v771 = vld [vmem:[%s7 + $0x8] sm:$0xff]
        %v772 = vld [vmem:[%s7 + $0x10] sm:$0xf]
        loop: start=0, step=1, limit=4
        $region109: #{gmn_forward.1} parent=99 // loop_pre_header
          _
        $region110: #{gmn_forward.1} parent=99 // loop_header
          %s774 = sphi 0, %s778
          %p775 = scmp.ge.s32.totalorder %s774, 4
          %v779 = vphi %v762, %v1774
        $region111: #{gmn_forward.1} parent=99 // loop_header_branch
          %777 = sbr.rel (%p775) target = $region115
        $region112: #{gmn_forward.1} parent=99 // loop_body
          %vm780 = vcmask 39936
          %v782 = vsel %vm780, %v763, 0
          %v785 = vsel %vm780, %v764, 0
          %v788 = vsel %vm780, %v765, 0
          %vm790 = vcmask 1044480
          %v792 = vsel %vm790, %v779, 0
          %794 = vmatprep.subr.mxu0 0.0
          %795 = vmatpush1.msra.mxu0 0.0
          %796 = vmatprep.subr.mxu0 0.0
          %797 = vmatpush1.msra.mxu0 0.0
          %798 = vmatprep.subr.mxu0 0.0
          %799 = vmatpush1.msra.mxu0 0.0
          %800 = vmatprep.subr.mxu0 0.0
          %801 = vmatpush1.msra.mxu0 0.0
          %802 = vmatprep.subr.mxu0 0.0
          %803 = vmatpush1.msra.mxu0 0.0
          %804 = vmatprep.subr.mxu0 0.0
          %805 = vmatpush1.msra.mxu0 0.0
          %806 = vmatprep.subr.mxu0 0.0
          %807 = vmatpush1.msra.mxu0 0.0
          %808 = vmatprep.subr.mxu0 0.0
          %809 = vmatpush1.msra.mxu0 0.0
          %810 = vmatprep.subr.mxu0 0.0
          %811 = vmatpush1.msra.mxu0 0.0
          %812 = vmatprep.subr.mxu0 0.0
          %813 = vmatpush1.msra.mxu0 0.0
          %814 = vmatprep.subr.mxu0 0.0
          %815 = vmatpush1.msra.mxu0 0.0
          %816 = vmatprep.subr.mxu0 0.0
          %817 = vmatpush1.msra.mxu0 0.0
          %818 = vmatprep.subr.mxu0 0.0
          %819 = vmatpush1.msra.mxu0 0.0
          %820 = vmatprep.subr.mxu0 0.0
          %821 = vmatpush1.msra.mxu0 0.0
          %822 = vmatprep.subr.mxu0 0.0
          %823 = vmatpush1.msra.mxu0 0.0
          %824 = vmatprep.subr.mxu0 0.0
          %825 = vmatpush1.msra.mxu0 %v792
          %826 = vmatprep.subr.mxu0 0.0
          %827 = vmatpush2.msra.mxu0 0.0
          %828 = vmatprep.subr.mxu0 0.0
          %829 = vmatpush2.msra.mxu0 0.0
          %830 = vmatprep.subr.mxu0 0.0
          %831 = vmatpush2.msra.mxu0 0.0
          %832 = vmatprep.subr.mxu0 0.0
          %833 = vmatpush2.msra.mxu0 0.0
          %834 = vmatprep.subr.mxu0 0.0
          %835 = vmatpush2.msra.mxu0 0.0
          %836 = vmatprep.subr.mxu0 0.0
          %837 = vmatpush2.msra.mxu0 0.0
          %838 = vmatprep.subr.mxu0 0.0
          %839 = vmatpush2.msra.mxu0 0.0
          %840 = vmatprep.subr.mxu0 0.0
          %841 = vmatpush2.msra.mxu0 0.0
          %842 = vmatprep.subr.mxu0 0.0
          %843 = vmatpush2.msra.mxu0 0.0
          %844 = vmatprep.subr.mxu0 0.0
          %845 = vmatpush2.msra.mxu0 0.0
          %846 = vmatprep.subr.mxu0 0.0
          %847 = vmatpush2.msra.mxu0 0.0
          %848 = vmatprep.subr.mxu0 0.0
          %849 = vmatpush2.msra.mxu0 0.0
          %850 = vmatprep.subr.mxu0 0.0
          %851 = vmatpush2.msra.mxu0 0.0
          %852 = vmatprep.subr.mxu0 0.0
          %853 = vmatpush2.msra.mxu0 0.0
          %854 = vmatprep.subr.mxu0 0.0
          %855 = vmatpush2.msra.mxu0 0.0
          %856 = vmatprep.subr.mxu0 0.0
          %857 = vmatpush2.msra.mxu0 0.0
          %858 = vmatprep.mubr.f32.mxu0 0.0
          %859 = vmatmul.mubr.f32.gmra.mxu0 %v782
          %v860 = vpop.f32.mrf.mxu0
          %v861 = vadd.f32 0.0, %v860
          %v862 = vpop.f32.mrf.mxu0
          %863 = vmatprep.mubr.f32.mxu0 0.0
          %864 = vmatmul.mubr.f32.gmra.mxu0 %v785
          %v865 = vpop.f32.mrf.mxu0
          %v866 = vadd.f32 0.0, %v865
          %v867 = vpop.f32.mrf.mxu0
          %868 = vmatprep.mubr.f32.mxu0 0.0
          %869 = vmatmul.mubr.f32.gmra.mxu0 %v788
          %v870 = vpop.f32.mrf.mxu0
          %v871 = vadd.f32 0.0, %v870
          %v872 = vpop.f32.mrf.mxu0
          %873 = vdwg.mxu0
          %v875 = vsel %vm780, %v766, 0
          %v878 = vsel %vm780, %v767, 0
          %v881 = vsel %vm780, %v768, 0
          %883 = vmatprep.subr.mxu0 0.0
          %884 = vmatpush1.msra.mxu0 0.0
          %885 = vmatprep.subr.mxu0 0.0
          %886 = vmatpush1.msra.mxu0 0.0
          %887 = vmatprep.subr.mxu0 0.0
          %888 = vmatpush1.msra.mxu0 0.0
          %889 = vmatprep.subr.mxu0 0.0
          %890 = vmatpush1.msra.mxu0 0.0
          %891 = vmatprep.subr.mxu0 0.0
          %892 = vmatpush1.msra.mxu0 0.0
          %893 = vmatprep.subr.mxu0 0.0
          %894 = vmatpush1.msra.mxu0 0.0
          %895 = vmatprep.subr.mxu0 0.0
          %896 = vmatpush1.msra.mxu0 0.0
          %897 = vmatprep.subr.mxu0 0.0
          %898 = vmatpush1.msra.mxu0 0.0
          %899 = vmatprep.subr.mxu0 0.0
          %900 = vmatpush1.msra.mxu0 0.0
          %901 = vmatprep.subr.mxu0 0.0
          %902 = vmatpush1.msra.mxu0 0.0
          %903 = vmatprep.subr.mxu0 0.0
          %904 = vmatpush1.msra.mxu0 0.0
          %905 = vmatprep.subr.mxu0 0.0
          %906 = vmatpush1.msra.mxu0 0.0
          %907 = vmatprep.subr.mxu0 0.0
          %908 = vmatpush1.msra.mxu0 0.0
          %909 = vmatprep.subr.mxu0 0.0
          %910 = vmatpush1.msra.mxu0 0.0
          %911 = vmatprep.subr.mxu0 0.0
          %912 = vmatpush1.msra.mxu0 0.0
          %913 = vmatprep.subr.mxu0 0.0
          %914 = vmatpush1.msra.mxu0 %v792
          %915 = vmatprep.subr.mxu0 0.0
          %916 = vmatpush2.msra.mxu0 0.0
          %917 = vmatprep.subr.mxu0 0.0
          %918 = vmatpush2.msra.mxu0 0.0
          %919 = vmatprep.subr.mxu0 0.0
          %920 = vmatpush2.msra.mxu0 0.0
          %921 = vmatprep.subr.mxu0 0.0
          %922 = vmatpush2.msra.mxu0 0.0
          %923 = vmatprep.subr.mxu0 0.0
          %924 = vmatpush2.msra.mxu0 0.0
          %925 = vmatprep.subr.mxu0 0.0
          %926 = vmatpush2.msra.mxu0 0.0
          %927 = vmatprep.subr.mxu0 0.0
          %928 = vmatpush2.msra.mxu0 0.0
          %929 = vmatprep.subr.mxu0 0.0
          %930 = vmatpush2.msra.mxu0 0.0
          %931 = vmatprep.subr.mxu0 0.0
          %932 = vmatpush2.msra.mxu0 0.0
          %933 = vmatprep.subr.mxu0 0.0
          %934 = vmatpush2.msra.mxu0 0.0
          %935 = vmatprep.subr.mxu0 0.0
          %936 = vmatpush2.msra.mxu0 0.0
          %937 = vmatprep.subr.mxu0 0.0
          %938 = vmatpush2.msra.mxu0 0.0
          %939 = vmatprep.subr.mxu0 0.0
          %940 = vmatpush2.msra.mxu0 0.0
          %941 = vmatprep.subr.mxu0 0.0
          %942 = vmatpush2.msra.mxu0 0.0
          %943 = vmatprep.subr.mxu0 0.0
          %944 = vmatpush2.msra.mxu0 0.0
          %945 = vmatprep.subr.mxu0 0.0
          %946 = vmatpush2.msra.mxu0 0.0
          %947 = vmatprep.mubr.f32.mxu0 0.0
          %948 = vmatmul.mubr.f32.gmra.mxu0 %v875
          %v949 = vpop.f32.mrf.mxu0
          %v950 = vadd.f32 0.0, %v949
          %v951 = vpop.f32.mrf.mxu0
          %952 = vmatprep.mubr.f32.mxu0 0.0
          %953 = vmatmul.mubr.f32.gmra.mxu0 %v878
          %v954 = vpop.f32.mrf.mxu0
          %v955 = vadd.f32 0.0, %v954
          %v956 = vpop.f32.mrf.mxu0
          %957 = vmatprep.mubr.f32.mxu0 0.0
          %958 = vmatmul.mubr.f32.gmra.mxu0 %v881
          %v959 = vpop.f32.mrf.mxu0
          %v960 = vadd.f32 0.0, %v959
          %v961 = vpop.f32.mrf.mxu0
          %962 = vdwg.mxu0
          %v963 = vsub.f32 %v861, %v950
          %v964 = vsub.f32 %v866, %v955
          %v965 = vsub.f32 %v871, %v960
          %v966 = vmul.f32 %v963, %v670
          %v967 = vmul.f32 %v964, %v670
          %v968 = vmul.f32 %v965, %v670
          %v969 = vmul.f32 %v966, %v966
          %v970 = vmul.f32 %v967, %v967
          %v971 = vmul.f32 %v968, %v968
          %972 = vadd.xlane.f32.xlu0 %v969
          %v973 = vpop.xlane.xlu0 %972
          %974 = vadd.xlane.f32.xlu0 %v970
          %v975 = vpop.xlane.xlu0 %974
          %vm976 = vcmask 1043456
          %v977 = vsel %vm976, %v971, 0.0
          %978 = vadd.xlane.f32.xlu0 %v977
          %v979 = vpop.xlane.xlu0 %978
          %v980 = vmul.f32 %v973, %v674
          %v981 = vmul.f32 %v975, %v674
          %v982 = vmul.f32 %v979, %v674
          %v983 = vadd.f32 %v770, %v980
          %v984 = vadd.f32 %v771, %v981
          %v985 = vadd.f32 %v772, %v982
          %s986 = smul.u32 %s774, 384
          %s987 = scalar_lea.vmem %s8, %s986
          %v988 = vld [vmem:[%s987] sm:$0xff]
          %v989 = vld [vmem:[%s987 + $0x8] sm:$0xff]
          %v990 = vld [vmem:[%s987 + $0x10] sm:$0xff]
          %v991 = vld [vmem:[%s987 + $0x18] sm:$0xff]
          %v992 = vld [vmem:[%s987 + $0x20] sm:$0xff]
          %v993 = vld [vmem:[%s987 + $0x28] sm:$0xff]
          %v994 = vld [vmem:[%s987 + $0x30] sm:$0xff]
          %v995 = vld [vmem:[%s987 + $0x38] sm:$0xff]
          %v996 = vld [vmem:[%s987 + $0x40] sm:$0xff]
          %v997 = vld [vmem:[%s987 + $0x48] sm:$0xff]
          %v998 = vld [vmem:[%s987 + $0x50] sm:$0xff]
          %v999 = vld [vmem:[%s987 + $0x58] sm:$0xff]
          %v1000 = vld [vmem:[%s987 + $0x60] sm:$0xff]
          %v1001 = vld [vmem:[%s987 + $0x68] sm:$0xff]
          %v1002 = vld [vmem:[%s987 + $0x70] sm:$0xff]
          %v1003 = vld [vmem:[%s987 + $0x78] sm:$0xff]
          %v1004 = vld [vmem:[%s987 + $0x80] sm:$0xff]
          %v1005 = vld [vmem:[%s987 + $0x88] sm:$0xff]
          %v1006 = vld [vmem:[%s987 + $0x90] sm:$0xff]
          %v1007 = vld [vmem:[%s987 + $0x98] sm:$0xff]
          %v1008 = vld [vmem:[%s987 + $0xa0] sm:$0xff]
          %v1009 = vld [vmem:[%s987 + $0xa8] sm:$0xff]
          %v1010 = vld [vmem:[%s987 + $0xb0] sm:$0xff]
          %v1011 = vld [vmem:[%s987 + $0xb8] sm:$0xff]
          %v1012 = vld [vmem:[%s987 + $0xc0] sm:$0xff]
          %v1013 = vld [vmem:[%s987 + $0xc8] sm:$0xff]
          %v1014 = vld [vmem:[%s987 + $0xd0] sm:$0xff]
          %v1015 = vld [vmem:[%s987 + $0xd8] sm:$0xff]
          %v1016 = vld [vmem:[%s987 + $0xe0] sm:$0xff]
          %v1017 = vld [vmem:[%s987 + $0xe8] sm:$0xff]
          %v1018 = vld [vmem:[%s987 + $0xf0] sm:$0xff]
          %v1019 = vld [vmem:[%s987 + $0xf8] sm:$0xff]
          %v1020 = vld [vmem:[%s987 + $0x100] sm:$0xff]
          %v1021 = vld [vmem:[%s987 + $0x108] sm:$0xff]
          %v1022 = vld [vmem:[%s987 + $0x110] sm:$0xff]
          %v1023 = vld [vmem:[%s987 + $0x118] sm:$0xff]
          %v1024 = vld [vmem:[%s987 + $0x120] sm:$0xff]
          %v1025 = vld [vmem:[%s987 + $0x128] sm:$0xff]
          %v1026 = vld [vmem:[%s987 + $0x130] sm:$0xff]
          %v1027 = vld [vmem:[%s987 + $0x138] sm:$0xff]
          %v1028 = vld [vmem:[%s987 + $0x140] sm:$0xff]
          %v1029 = vld [vmem:[%s987 + $0x148] sm:$0xff]
          %v1030 = vld [vmem:[%s987 + $0x150] sm:$0xff]
          %v1031 = vld [vmem:[%s987 + $0x158] sm:$0xff]
          %v1032 = vld [vmem:[%s987 + $0x160] sm:$0xff]
          %v1033 = vld [vmem:[%s987 + $0x168] sm:$0xff]
          %v1034 = vld [vmem:[%s987 + $0x170] sm:$0xff]
          %v1035 = vld [vmem:[%s987 + $0x178] sm:$0xff]
          %s1036 = scalar_lea.vmem %s9, %s774
          %v1037 = vld [vmem:[%s1036] sm:$0x1]
          %v1039 = vlaneseq
          %v1040 = vshrl.u32 %v1039, 7
          %v1041 = vsub.s32 0, %v1040
          %v1042 = vrot.slane %v1037, %v1041
          %1044 = vmatprep.subr.mxu0 0.0
          %1045 = vmatpush1.msra.mxu0 %v1003
          %1046 = vmatprep.subr.mxu0 0.0
          %1047 = vmatpush1.msra.mxu0 %v1002
          %1048 = vmatprep.subr.mxu0 0.0
          %1049 = vmatpush1.msra.mxu0 %v1001
          %1050 = vmatprep.subr.mxu0 0.0
          %1051 = vmatpush1.msra.mxu0 %v1000
          %1052 = vmatprep.subr.mxu0 0.0
          %1053 = vmatpush1.msra.mxu0 %v999
          %1054 = vmatprep.subr.mxu0 0.0
          %1055 = vmatpush1.msra.mxu0 %v998
          %1056 = vmatprep.subr.mxu0 0.0
          %1057 = vmatpush1.msra.mxu0 %v997
          %1058 = vmatprep.subr.mxu0 0.0
          %1059 = vmatpush1.msra.mxu0 %v996
          %1060 = vmatprep.subr.mxu0 0.0
          %1061 = vmatpush1.msra.mxu0 %v995
          %1062 = vmatprep.subr.mxu0 0.0
          %1063 = vmatpush1.msra.mxu0 %v994
          %1064 = vmatprep.subr.mxu0 0.0
          %1065 = vmatpush1.msra.mxu0 %v993
          %1066 = vmatprep.subr.mxu0 0.0
          %1067 = vmatpush1.msra.mxu0 %v992
          %1068 = vmatprep.subr.mxu0 0.0
          %1069 = vmatpush1.msra.mxu0 %v991
          %1070 = vmatprep.subr.mxu0 0.0
          %1071 = vmatpush1.msra.mxu0 %v990
          %1072 = vmatprep.subr.mxu0 0.0
          %1073 = vmatpush1.msra.mxu0 %v989
          %1074 = vmatprep.subr.mxu0 0.0
          %1075 = vmatpush1.msra.mxu0 %v988
          %1076 = vmatprep.subr.mxu0 0.0
          %1077 = vmatpush2.msra.mxu0 %v1019
          %1078 = vmatprep.subr.mxu0 0.0
          %1079 = vmatpush2.msra.mxu0 %v1018
          %1080 = vmatprep.subr.mxu0 0.0
          %1081 = vmatpush2.msra.mxu0 %v1017
          %1082 = vmatprep.subr.mxu0 0.0
          %1083 = vmatpush2.msra.mxu0 %v1016
          %1084 = vmatprep.subr.mxu0 0.0
          %1085 = vmatpush2.msra.mxu0 %v1015
          %1086 = vmatprep.subr.mxu0 0.0
          %1087 = vmatpush2.msra.mxu0 %v1014
          %1088 = vmatprep.subr.mxu0 0.0
          %1089 = vmatpush2.msra.mxu0 %v1013
          %1090 = vmatprep.subr.mxu0 0.0
          %1091 = vmatpush2.msra.mxu0 %v1012
          %1092 = vmatprep.subr.mxu0 0.0
          %1093 = vmatpush2.msra.mxu0 %v1011
          %1094 = vmatprep.subr.mxu0 0.0
          %1095 = vmatpush2.msra.mxu0 %v1010
          %1096 = vmatprep.subr.mxu0 0.0
          %1097 = vmatpush2.msra.mxu0 %v1009
          %1098 = vmatprep.subr.mxu0 0.0
          %1099 = vmatpush2.msra.mxu0 %v1008
          %1100 = vmatprep.subr.mxu0 0.0
          %1101 = vmatpush2.msra.mxu0 %v1007
          %1102 = vmatprep.subr.mxu0 0.0
          %1103 = vmatpush2.msra.mxu0 %v1006
          %1104 = vmatprep.subr.mxu0 0.0
          %1105 = vmatpush2.msra.mxu0 %v1005
          %1106 = vmatprep.subr.mxu0 0.0
          %1107 = vmatpush2.msra.mxu0 %v1004
          %1108 = vmatprep.mubr.f32.mxu0 %v950
          %1109 = vmatmul.mubr.f32.gmra.mxu0 %v861
          %v1110 = vpop.f32.mrf.mxu0
          %v1111 = vadd.f32 %v1042, %v1110
          %v1112 = vpop.f32.mrf.mxu0
          %1113 = vmatprep.mubr.f32.mxu0 %v955
          %1114 = vmatmul.mubr.f32.gmra.mxu0 %v866
          %v1115 = vpop.f32.mrf.mxu0
          %v1116 = vadd.f32 %v1042, %v1115
          %v1117 = vpop.f32.mrf.mxu0
          %1118 = vmatprep.mubr.f32.mxu0 %v960
          %1119 = vmatmul.mubr.f32.gmra.mxu0 %v871
          %v1120 = vpop.f32.mrf.mxu0
          %v1121 = vadd.f32 %v1042, %v1120
          %v1122 = vpop.f32.mrf.mxu0
          %1123 = vdwg.mxu0
          %1124 = vmatprep.subr.mxu0 0.0
          %1125 = vmatpush1.msra.mxu0 %v1035
          %1126 = vmatprep.subr.mxu0 0.0
          %1127 = vmatpush1.msra.mxu0 %v1034
          %1128 = vmatprep.subr.mxu0 0.0
          %1129 = vmatpush1.msra.mxu0 %v1033
          %1130 = vmatprep.subr.mxu0 0.0
          %1131 = vmatpush1.msra.mxu0 %v1032
          %1132 = vmatprep.subr.mxu0 0.0
          %1133 = vmatpush1.msra.mxu0 %v1031
          %1134 = vmatprep.subr.mxu0 0.0
          %1135 = vmatpush1.msra.mxu0 %v1030
          %1136 = vmatprep.subr.mxu0 0.0
          %1137 = vmatpush1.msra.mxu0 %v1029
          %1138 = vmatprep.subr.mxu0 0.0
          %1139 = vmatpush1.msra.mxu0 %v1028
          %1140 = vmatprep.subr.mxu0 0.0
          %1141 = vmatpush1.msra.mxu0 %v1027
          %1142 = vmatprep.subr.mxu0 0.0
          %1143 = vmatpush1.msra.mxu0 %v1026
          %1144 = vmatprep.subr.mxu0 0.0
          %1145 = vmatpush1.msra.mxu0 %v1025
          %1146 = vmatprep.subr.mxu0 0.0
          %1147 = vmatpush1.msra.mxu0 %v1024
          %1148 = vmatprep.subr.mxu0 0.0
          %1149 = vmatpush1.msra.mxu0 %v1023
          %1150 = vmatprep.subr.mxu0 0.0
          %1151 = vmatpush1.msra.mxu0 %v1022
          %1152 = vmatprep.subr.mxu0 0.0
          %1153 = vmatpush1.msra.mxu0 %v1021
          %1154 = vmatprep.subr.mxu0 0.0
          %1155 = vmatpush1.msra.mxu0 %v1020
          %1156 = vmatprep.subr.mxu0 0.0
          %1157 = vmatpush2.msra.mxu0 0.0
          %1158 = vmatprep.subr.mxu0 0.0
          %1159 = vmatpush2.msra.mxu0 0.0
          %1160 = vmatprep.subr.mxu0 0.0
          %1161 = vmatpush2.msra.mxu0 0.0
          %1162 = vmatprep.subr.mxu0 0.0
          %1163 = vmatpush2.msra.mxu0 0.0
          %1164 = vmatprep.subr.mxu0 0.0
          %1165 = vmatpush2.msra.mxu0 0.0
          %1166 = vmatprep.subr.mxu0 0.0
          %1167 = vmatpush2.msra.mxu0 0.0
          %1168 = vmatprep.subr.mxu0 0.0
          %1169 = vmatpush2.msra.mxu0 0.0
          %1170 = vmatprep.subr.mxu0 0.0
          %1171 = vmatpush2.msra.mxu0 0.0
          %1172 = vmatprep.subr.mxu0 0.0
          %1173 = vmatpush2.msra.mxu0 0.0
          %1174 = vmatprep.subr.mxu0 0.0
          %1175 = vmatpush2.msra.mxu0 0.0
          %1176 = vmatprep.subr.mxu0 0.0
          %1177 = vmatpush2.msra.mxu0 0.0
          %1178 = vmatprep.subr.mxu0 0.0
          %1179 = vmatpush2.msra.mxu0 0.0
          %1180 = vmatprep.subr.mxu0 0.0
          %1181 = vmatpush2.msra.mxu0 0.0
          %1182 = vmatprep.subr.mxu0 0.0
          %1183 = vmatpush2.msra.mxu0 0.0
          %1184 = vmatprep.subr.mxu0 0.0
          %1185 = vmatpush2.msra.mxu0 0.0
          %1186 = vmatprep.subr.mxu0 0.0
          %1187 = vmatpush2.msra.mxu0 0.0
          %1188 = vmatprep.mubr.f32.mxu0 0.0
          %1189 = vmatmul.mubr.f32.gmra.mxu0 %v983
          %v1190 = vpop.f32.mrf.mxu0
          %v1191 = vadd.f32 %v1111, %v1190
          %v1192 = vpop.f32.mrf.mxu0
          %1193 = vmatprep.mubr.f32.mxu0 0.0
          %1194 = vmatmul.mubr.f32.gmra.mxu0 %v984
          %v1195 = vpop.f32.mrf.mxu0
          %v1196 = vadd.f32 %v1116, %v1195
          %v1197 = vpop.f32.mrf.mxu0
          %1198 = vmatprep.mubr.f32.mxu0 0.0
          %1199 = vmatmul.mubr.f32.gmra.mxu0 %v985
          %v1200 = vpop.f32.mrf.mxu0
          %v1201 = vadd.f32 %v1121, %v1200
          %v1202 = vpop.f32.mrf.mxu0
          %1203 = vdwg.mxu0
          %vm1204 = vcmp.gt.f32.partialorder %v1191, 0.0
          %vm1205 = vcmp.gt.f32.partialorder %v1196, 0.0
          %vm1206 = vcmp.gt.f32.partialorder %v1201, 0.0
          %v1207 = vmul.f32 %v1191, 0.2
          %v1208 = vmul.f32 %v1196, 0.2
          %v1209 = vmul.f32 %v1201, 0.2
          %v1210 = vsel %vm1204, %v1191, %v1207
          %v1211 = vsel %vm1205, %v1196, %v1208
          %v1212 = vsel %vm1206, %v1201, %v1209
          %s1213 = smul.u32 %s774, 32
          %s1214 = scalar_lea.vmem %s10, %s1213
          %v1215 = vld [vmem:[%s1214] sm:$0xff]
          %v1216 = vld [vmem:[%s1214 + $0x8] sm:$0xff]
          %v1217 = vld [vmem:[%s1214 + $0x10] sm:$0xff]
          %v1218 = vld [vmem:[%s1214 + $0x18] sm:$0xff]
          %s1219 = scalar_lea.vmem %s11, %s774
          %v1220 = vld [vmem:[%s1219] sm:$0x1]
          %v1222 = vlaneseq
          %v1223 = vshrl.u32 %v1222, 7
          %v1224 = vsub.s32 0, %v1223
          %v1225 = vrot.slane %v1220, %v1224
          %vm1227 = vcmask 261120
          %v1229 = vsel %vm1227, %v1210, 0
          %v1232 = vsel %vm1227, %v1211, 0
          %v1235 = vsel %vm1227, %v1212, 0
          %1237 = vmatprep.subr.mxu0 0.0
          %1238 = vmatpush1.msra.mxu0 0.0
          %1239 = vmatprep.subr.mxu0 0.0
          %1240 = vmatpush1.msra.mxu0 0.0
          %1241 = vmatprep.subr.mxu0 0.0
          %1242 = vmatpush1.msra.mxu0 0.0
          %1243 = vmatprep.subr.mxu0 0.0
          %1244 = vmatpush1.msra.mxu0 0.0
          %1245 = vmatprep.subr.mxu0 0.0
          %1246 = vmatpush1.msra.mxu0 0.0
          %1247 = vmatprep.subr.mxu0 0.0
          %1248 = vmatpush1.msra.mxu0 0.0
          %1249 = vmatprep.subr.mxu0 0.0
          %1250 = vmatpush1.msra.mxu0 0.0
          %1251 = vmatprep.subr.mxu0 0.0
          %1252 = vmatpush1.msra.mxu0 0.0
          %1253 = vmatprep.subr.mxu0 0.0
          %1254 = vmatpush1.msra.mxu0 0.0
          %1255 = vmatprep.subr.mxu0 0.0
          %1256 = vmatpush1.msra.mxu0 0.0
          %1257 = vmatprep.subr.mxu0 0.0
          %1258 = vmatpush1.msra.mxu0 0.0
          %1259 = vmatprep.subr.mxu0 0.0
          %1260 = vmatpush1.msra.mxu0 0.0
          %1261 = vmatprep.subr.mxu0 0.0
          %1262 = vmatpush1.msra.mxu0 %v1218
          %1263 = vmatprep.subr.mxu0 0.0
          %1264 = vmatpush1.msra.mxu0 %v1217
          %1265 = vmatprep.subr.mxu0 0.0
          %1266 = vmatpush1.msra.mxu0 %v1216
          %1267 = vmatprep.subr.mxu0 0.0
          %1268 = vmatpush1.msra.mxu0 %v1215
          %1269 = vmatprep.subr.mxu0 0.0
          %1270 = vmatpush2.msra.mxu0 0.0
          %1271 = vmatprep.subr.mxu0 0.0
          %1272 = vmatpush2.msra.mxu0 0.0
          %1273 = vmatprep.subr.mxu0 0.0
          %1274 = vmatpush2.msra.mxu0 0.0
          %1275 = vmatprep.subr.mxu0 0.0
          %1276 = vmatpush2.msra.mxu0 0.0
          %1277 = vmatprep.subr.mxu0 0.0
          %1278 = vmatpush2.msra.mxu0 0.0
          %1279 = vmatprep.subr.mxu0 0.0
          %1280 = vmatpush2.msra.mxu0 0.0
          %1281 = vmatprep.subr.mxu0 0.0
          %1282 = vmatpush2.msra.mxu0 0.0
          %1283 = vmatprep.subr.mxu0 0.0
          %1284 = vmatpush2.msra.mxu0 0.0
          %1285 = vmatprep.subr.mxu0 0.0
          %1286 = vmatpush2.msra.mxu0 0.0
          %1287 = vmatprep.subr.mxu0 0.0
          %1288 = vmatpush2.msra.mxu0 0.0
          %1289 = vmatprep.subr.mxu0 0.0
          %1290 = vmatpush2.msra.mxu0 0.0
          %1291 = vmatprep.subr.mxu0 0.0
          %1292 = vmatpush2.msra.mxu0 0.0
          %1293 = vmatprep.subr.mxu0 0.0
          %1294 = vmatpush2.msra.mxu0 0.0
          %1295 = vmatprep.subr.mxu0 0.0
          %1296 = vmatpush2.msra.mxu0 0.0
          %1297 = vmatprep.subr.mxu0 0.0
          %1298 = vmatpush2.msra.mxu0 0.0
          %1299 = vmatprep.subr.mxu0 0.0
          %1300 = vmatpush2.msra.mxu0 0.0
          %1301 = vmatprep.mubr.f32.mxu0 0.0
          %1302 = vmatmul.mubr.f32.gmra.mxu0 %v1229
          %v1303 = vpop.f32.mrf.mxu0
          %v1304 = vadd.f32 %v1225, %v1303
          %v1305 = vpop.f32.mrf.mxu0
          %1306 = vmatprep.mubr.f32.mxu0 0.0
          %1307 = vmatmul.mubr.f32.gmra.mxu0 %v1232
          %v1308 = vpop.f32.mrf.mxu0
          %v1309 = vadd.f32 %v1225, %v1308
          %v1310 = vpop.f32.mrf.mxu0
          %1311 = vmatprep.mubr.f32.mxu0 0.0
          %1312 = vmatmul.mubr.f32.gmra.mxu0 %v1235
          %v1313 = vpop.f32.mrf.mxu0
          %v1314 = vadd.f32 %v1225, %v1313
          %v1315 = vpop.f32.mrf.mxu0
          %1316 = vdwg.mxu0
          %vm1317 = vcmp.gt.f32.partialorder %v1304, 0.0
          %vm1318 = vcmp.gt.f32.partialorder %v1309, 0.0
          %vm1319 = vcmp.gt.f32.partialorder %v1314, 0.0
          %v1320 = vmul.f32 %v1304, 0.2
          %v1321 = vmul.f32 %v1309, 0.2
          %v1322 = vmul.f32 %v1314, 0.2
          %v1323 = vsel %vm1317, %v1304, %v1320
          %v1324 = vsel %vm1318, %v1309, %v1321
          %v1325 = vsel %vm1319, %v1314, %v1322
          %s1326 = smul.u32 %s774, 128
          %s1327 = scalar_lea.vmem %s12, %s1326
          %v1328 = vld [vmem:[%s1327] sm:$0xff]
          %v1329 = vld [vmem:[%s1327 + $0x8] sm:$0xff]
          %v1330 = vld [vmem:[%s1327 + $0x10] sm:$0xff]
          %v1331 = vld [vmem:[%s1327 + $0x18] sm:$0xff]
          %v1332 = vld [vmem:[%s1327 + $0x20] sm:$0xff]
          %v1333 = vld [vmem:[%s1327 + $0x28] sm:$0xff]
          %v1334 = vld [vmem:[%s1327 + $0x30] sm:$0xff]
          %v1335 = vld [vmem:[%s1327 + $0x38] sm:$0xff]
          %v1336 = vld [vmem:[%s1327 + $0x40] sm:$0xff]
          %v1337 = vld [vmem:[%s1327 + $0x48] sm:$0xff]
          %v1338 = vld [vmem:[%s1327 + $0x50] sm:$0xff]
          %v1339 = vld [vmem:[%s1327 + $0x58] sm:$0xff]
          %v1340 = vld [vmem:[%s1327 + $0x60] sm:$0xff]
          %v1341 = vld [vmem:[%s1327 + $0x68] sm:$0xff]
          %v1342 = vld [vmem:[%s1327 + $0x70] sm:$0xff]
          %v1343 = vld [vmem:[%s1327 + $0x78] sm:$0xff]
          %s1344 = scalar_lea.vmem %s13, %s774
          %v1345 = vld [vmem:[%s1344] sm:$0x1]
          %v1347 = vlaneseq
          %v1348 = vshrl.u32 %v1347, 7
          %v1349 = vsub.s32 0, %v1348
          %v1350 = vrot.slane %v1345, %v1349
          %1352 = vmatprep.subr.mxu0 0.0
          %1353 = vmatpush1.msra.mxu0 %v1343
          %1354 = vmatprep.subr.mxu0 0.0
          %1355 = vmatpush1.msra.mxu0 %v1342
          %1356 = vmatprep.subr.mxu0 0.0
          %1357 = vmatpush1.msra.mxu0 %v1341
          %1358 = vmatprep.subr.mxu0 0.0
          %1359 = vmatpush1.msra.mxu0 %v1340
          %1360 = vmatprep.subr.mxu0 0.0
          %1361 = vmatpush1.msra.mxu0 %v1339
          %1362 = vmatprep.subr.mxu0 0.0
          %1363 = vmatpush1.msra.mxu0 %v1338
          %1364 = vmatprep.subr.mxu0 0.0
          %1365 = vmatpush1.msra.mxu0 %v1337
          %1366 = vmatprep.subr.mxu0 0.0
          %1367 = vmatpush1.msra.mxu0 %v1336
          %1368 = vmatprep.subr.mxu0 0.0
          %1369 = vmatpush1.msra.mxu0 %v1335
          %1370 = vmatprep.subr.mxu0 0.0
          %1371 = vmatpush1.msra.mxu0 %v1334
          %1372 = vmatprep.subr.mxu0 0.0
          %1373 = vmatpush1.msra.mxu0 %v1333
          %1374 = vmatprep.subr.mxu0 0.0
          %1375 = vmatpush1.msra.mxu0 %v1332
          %1376 = vmatprep.subr.mxu0 0.0
          %1377 = vmatpush1.msra.mxu0 %v1331
          %1378 = vmatprep.subr.mxu0 0.0
          %1379 = vmatpush1.msra.mxu0 %v1330
          %1380 = vmatprep.subr.mxu0 0.0
          %1381 = vmatpush1.msra.mxu0 %v1329
          %1382 = vmatprep.subr.mxu0 0.0
          %1383 = vmatpush1.msra.mxu0 %v1328
          %1384 = vmatprep.subr.mxu0 0.0
          %1385 = vmatpush2.msra.mxu0 0.0
          %1386 = vmatprep.subr.mxu0 0.0
          %1387 = vmatpush2.msra.mxu0 0.0
          %1388 = vmatprep.subr.mxu0 0.0
          %1389 = vmatpush2.msra.mxu0 0.0
          %1390 = vmatprep.subr.mxu0 0.0
          %1391 = vmatpush2.msra.mxu0 0.0
          %1392 = vmatprep.subr.mxu0 0.0
          %1393 = vmatpush2.msra.mxu0 0.0
          %1394 = vmatprep.subr.mxu0 0.0
          %1395 = vmatpush2.msra.mxu0 0.0
          %1396 = vmatprep.subr.mxu0 0.0
          %1397 = vmatpush2.msra.mxu0 0.0
          %1398 = vmatprep.subr.mxu0 0.0
          %1399 = vmatpush2.msra.mxu0 0.0
          %1400 = vmatprep.subr.mxu0 0.0
          %1401 = vmatpush2.msra.mxu0 0.0
          %1402 = vmatprep.subr.mxu0 0.0
          %1403 = vmatpush2.msra.mxu0 0.0
          %1404 = vmatprep.subr.mxu0 0.0
          %1405 = vmatpush2.msra.mxu0 0.0
          %1406 = vmatprep.subr.mxu0 0.0
          %1407 = vmatpush2.msra.mxu0 0.0
          %1408 = vmatprep.subr.mxu0 0.0
          %1409 = vmatpush2.msra.mxu0 0.0
          %1410 = vmatprep.subr.mxu0 0.0
          %1411 = vmatpush2.msra.mxu0 0.0
          %1412 = vmatprep.subr.mxu0 0.0
          %1413 = vmatpush2.msra.mxu0 0.0
          %1414 = vmatprep.subr.mxu0 0.0
          %1415 = vmatpush2.msra.mxu0 0.0
          %1416 = vmatprep.mubr.f32.mxu0 0.0
          %1417 = vmatmul.mubr.f32.gmra.mxu0 %v1323
          %v1418 = vpop.f32.mrf.mxu0
          %v1419 = vadd.f32 %v1350, %v1418
          %v1420 = vpop.f32.mrf.mxu0
          %1421 = vmatprep.mubr.f32.mxu0 0.0
          %1422 = vmatmul.mubr.f32.gmra.mxu0 %v1324
          %v1423 = vpop.f32.mrf.mxu0
          %v1424 = vadd.f32 %v1350, %v1423
          %v1425 = vpop.f32.mrf.mxu0
          %1426 = vmatprep.mubr.f32.mxu0 0.0
          %1427 = vmatmul.mubr.f32.gmra.mxu0 %v1325
          %v1428 = vpop.f32.mrf.mxu0
          %v1429 = vadd.f32 %v1350, %v1428
          %v1430 = vpop.f32.mrf.mxu0
          %1431 = vdwg.mxu0
          %vm1432 = vcmp.gt.f32.partialorder %v1419, 0.0
          %vm1433 = vcmp.gt.f32.partialorder %v1424, 0.0
          %vm1434 = vcmp.gt.f32.partialorder %v1429, 0.0
          %v1435 = vmul.f32 %v1419, 0.2
          %v1436 = vmul.f32 %v1424, 0.2
          %v1437 = vmul.f32 %v1429, 0.2
          %v1438 = vsel %vm1432, %v1419, %v1435
          %v1439 = vsel %vm1433, %v1424, %v1436
          %v1440 = vsel %vm1434, %v1429, %v1437
          %s1441 = scalar_lea.vmem %s14, %s774
          %v1442 = vld [vmem:[%s1441] sm:$0x1]
          %v1444 = vlaneseq
          %v1445 = vshrl.u32 %v1444, 7
          %v1446 = vsub.s32 0, %v1445
          %v1447 = vrot.slane %v1442, %v1446
          %v1449 = vmul.f32 %v1438, %v1447
          %v1450 = vmul.f32 %v1439, %v1447
          %v1451 = vmul.f32 %v1440, %v1447
          %v1452 = vsel %vm1227, %v1449, 0.0
          %1453 = vadd.xlane.f32.xlu0 %v1452
          %v1454 = vpop.xlane.xlu0 %1453
          %v1455 = vsel %vm1227, %v1450, 0.0
          %1456 = vadd.xlane.f32.xlu0 %v1455
          %v1457 = vpop.xlane.xlu0 %1456
          %vm1458 = vcmask 257024
          %v1459 = vsel %vm1458, %v1451, 0.0
          %1460 = vadd.xlane.f32.xlu0 %v1459
          %v1461 = vpop.xlane.xlu0 %1460
          %s1462 = scalar_lea.vmem %s15, %s774
          %v1463 = vld [vmem:[%s1462] sm:$0x1]
          %v1465 = vlaneseq
          %v1466 = vshrl.u32 %v1465, 7
          %v1467 = vsub.s32 0, %v1466
          %v1468 = vrot.slane %v1463, %v1467
          %v1470 = vadd.f32 %v1454, %v1468
          %v1471 = vadd.f32 %v1457, %v1468
          %v1472 = vadd.f32 %v1461, %v1468
          %1474 = vset.pattern.permute.xlu0 0
          %1475 = vperm.xlu0 %1474, %v1470
          %v1476 = vpop.permute.xlu0 %1475
          %1479 = vset.pattern.permute.xlu0 0
          %1480 = vperm.xlu0 %1479, %v1471
          %v1481 = vpop.permute.xlu0 %1480
          %1484 = vset.pattern.permute.xlu0 0
          %1485 = vperm.xlu0 %1484, %v1472
          %v1486 = vpop.permute.xlu0 %1485
          %v1488 = vmul.f32 %v966, %v1476
          %v1489 = vmul.f32 %v967, %v1481
          %v1490 = vmul.f32 %v968, %v1486
          %v1491 = vadd.f32 %v1323, %v1488
          %v1492 = vadd.f32 %v1324, %v1489
          %v1493 = vadd.f32 %v1325, %v1490
          %vm1494 = vcmask 162816
          %v1496 = vsel %vm1494, %v769, 0
          %v1499 = vsel %vm976, %v1493, 0
          %1501 = vmatprep.subr.mxu0 0.0
          %1502 = vmatpush1.msra.mxu0 0.0
          %1503 = vmatprep.subr.mxu0 0.0
          %1504 = vmatpush1.msra.mxu0 0.0
          %1505 = vmatprep.subr.mxu0 0.0
          %1506 = vmatpush1.msra.mxu0 0.0
          %1507 = vmatprep.subr.mxu0 0.0
          %1508 = vmatpush1.msra.mxu0 0.0
          %1509 = vmatprep.subr.mxu0 0.0
          %1510 = vmatpush1.msra.mxu0 0.0
          %1511 = vmatprep.subr.mxu0 0.0
          %1512 = vmatpush1.msra.mxu0 0.0
          %1513 = vmatprep.subr.mxu0 0.0
          %1514 = vmatpush1.msra.mxu0 0.0
          %1515 = vmatprep.subr.mxu0 0.0
          %1516 = vmatpush1.msra.mxu0 0.0
          %1517 = vmatprep.subr.mxu0 0.0
          %1518 = vmatpush1.msra.mxu0 0.0
          %1519 = vmatprep.subr.mxu0 0.0
          %1520 = vmatpush1.msra.mxu0 0.0
          %1521 = vmatprep.subr.mxu0 0.0
          %1522 = vmatpush1.msra.mxu0 0.0
          %1523 = vmatprep.subr.mxu0 0.0
          %1524 = vmatpush1.msra.mxu0 0.0
          %1525 = vmatprep.subr.mxu0 0.0
          %1526 = vmatpush1.msra.mxu0 0.0
          %1527 = vmatprep.subr.mxu0 0.0
          %1528 = vmatpush1.msra.mxu0 %v1499
          %1529 = vmatprep.subr.mxu0 0.0
          %1530 = vmatpush1.msra.mxu0 %v1492
          %1531 = vmatprep.subr.mxu0 0.0
          %1532 = vmatpush1.msra.mxu0 %v1491
          %1533 = vmatprep.subr.mxu0 0.0
          %1534 = vmatpush2.msra.mxu0 0.0
          %1535 = vmatprep.subr.mxu0 0.0
          %1536 = vmatpush2.msra.mxu0 0.0
          %1537 = vmatprep.subr.mxu0 0.0
          %1538 = vmatpush2.msra.mxu0 0.0
          %1539 = vmatprep.subr.mxu0 0.0
          %1540 = vmatpush2.msra.mxu0 0.0
          %1541 = vmatprep.subr.mxu0 0.0
          %1542 = vmatpush2.msra.mxu0 0.0
          %1543 = vmatprep.subr.mxu0 0.0
          %1544 = vmatpush2.msra.mxu0 0.0
          %1545 = vmatprep.subr.mxu0 0.0
          %1546 = vmatpush2.msra.mxu0 0.0
          %1547 = vmatprep.subr.mxu0 0.0
          %1548 = vmatpush2.msra.mxu0 0.0
          %1549 = vmatprep.subr.mxu0 0.0
          %1550 = vmatpush2.msra.mxu0 0.0
          %1551 = vmatprep.subr.mxu0 0.0
          %1552 = vmatpush2.msra.mxu0 0.0
          %1553 = vmatprep.subr.mxu0 0.0
          %1554 = vmatpush2.msra.mxu0 0.0
          %1555 = vmatprep.subr.mxu0 0.0
          %1556 = vmatpush2.msra.mxu0 0.0
          %1557 = vmatprep.subr.mxu0 0.0
          %1558 = vmatpush2.msra.mxu0 0.0
          %1559 = vmatprep.subr.mxu0 0.0
          %1560 = vmatpush2.msra.mxu0 0.0
          %1561 = vmatprep.subr.mxu0 0.0
          %1562 = vmatpush2.msra.mxu0 0.0
          %1563 = vmatprep.subr.mxu0 0.0
          %1564 = vmatpush2.msra.mxu0 0.0
          %1565 = vmatprep.mubr.f32.mxu0 0.0
          %1566 = vmatmul.mubr.f32.gmra.mxu0 %v1496
          %v1567 = vpop.f32.mrf.mxu0
          %v1568 = vadd.f32 0.0, %v1567
          %v1569 = vpop.f32.mrf.mxu0
          %1570 = vdwg.mxu0
          %s1571 = smul.u32 %s774, 256
          %s1572 = scalar_lea.vmem %s16, %s1571
          %v1573 = vld [vmem:[%s1572] sm:$0xff]
          %v1574 = vld [vmem:[%s1572 + $0x8] sm:$0xff]
          %v1575 = vld [vmem:[%s1572 + $0x10] sm:$0xff]
          %v1576 = vld [vmem:[%s1572 + $0x18] sm:$0xff]
          %v1577 = vld [vmem:[%s1572 + $0x20] sm:$0xff]
          %v1578 = vld [vmem:[%s1572 + $0x28] sm:$0xff]
          %v1579 = vld [vmem:[%s1572 + $0x30] sm:$0xff]
          %v1580 = vld [vmem:[%s1572 + $0x38] sm:$0xff]
          %v1581 = vld [vmem:[%s1572 + $0x40] sm:$0xff]
          %v1582 = vld [vmem:[%s1572 + $0x48] sm:$0xff]
          %v1583 = vld [vmem:[%s1572 + $0x50] sm:$0xff]
          %v1584 = vld [vmem:[%s1572 + $0x58] sm:$0xff]
          %v1585 = vld [vmem:[%s1572 + $0x60] sm:$0xff]
          %v1586 = vld [vmem:[%s1572 + $0x68] sm:$0xff]
          %v1587 = vld [vmem:[%s1572 + $0x70] sm:$0xff]
          %v1588 = vld [vmem:[%s1572 + $0x78] sm:$0xff]
          %v1589 = vld [vmem:[%s1572 + $0x80] sm:$0xff]
          %v1590 = vld [vmem:[%s1572 + $0x88] sm:$0xff]
          %v1591 = vld [vmem:[%s1572 + $0x90] sm:$0xff]
          %v1592 = vld [vmem:[%s1572 + $0x98] sm:$0xff]
          %v1593 = vld [vmem:[%s1572 + $0xa0] sm:$0xff]
          %v1594 = vld [vmem:[%s1572 + $0xa8] sm:$0xff]
          %v1595 = vld [vmem:[%s1572 + $0xb0] sm:$0xff]
          %v1596 = vld [vmem:[%s1572 + $0xb8] sm:$0xff]
          %v1597 = vld [vmem:[%s1572 + $0xc0] sm:$0xff]
          %v1598 = vld [vmem:[%s1572 + $0xc8] sm:$0xff]
          %v1599 = vld [vmem:[%s1572 + $0xd0] sm:$0xff]
          %v1600 = vld [vmem:[%s1572 + $0xd8] sm:$0xff]
          %v1601 = vld [vmem:[%s1572 + $0xe0] sm:$0xff]
          %v1602 = vld [vmem:[%s1572 + $0xe8] sm:$0xff]
          %v1603 = vld [vmem:[%s1572 + $0xf0] sm:$0xff]
          %v1604 = vld [vmem:[%s1572 + $0xf8] sm:$0xff]
          %s1605 = scalar_lea.vmem %s17, %s774
          %v1606 = vld [vmem:[%s1605] sm:$0x1]
          %v1608 = vlaneseq
          %v1609 = vshrl.u32 %v1608, 7
          %v1610 = vsub.s32 0, %v1609
          %v1611 = vrot.slane %v1606, %v1610
          %1613 = vmatprep.subr.mxu0 0.0
          %1614 = vmatpush1.msra.mxu0 %v1588
          %1615 = vmatprep.subr.mxu0 0.0
          %1616 = vmatpush1.msra.mxu0 %v1587
          %1617 = vmatprep.subr.mxu0 0.0
          %1618 = vmatpush1.msra.mxu0 %v1586
          %1619 = vmatprep.subr.mxu0 0.0
          %1620 = vmatpush1.msra.mxu0 %v1585
          %1621 = vmatprep.subr.mxu0 0.0
          %1622 = vmatpush1.msra.mxu0 %v1584
          %1623 = vmatprep.subr.mxu0 0.0
          %1624 = vmatpush1.msra.mxu0 %v1583
          %1625 = vmatprep.subr.mxu0 0.0
          %1626 = vmatpush1.msra.mxu0 %v1582
          %1627 = vmatprep.subr.mxu0 0.0
          %1628 = vmatpush1.msra.mxu0 %v1581
          %1629 = vmatprep.subr.mxu0 0.0
          %1630 = vmatpush1.msra.mxu0 %v1580
          %1631 = vmatprep.subr.mxu0 0.0
          %1632 = vmatpush1.msra.mxu0 %v1579
          %1633 = vmatprep.subr.mxu0 0.0
          %1634 = vmatpush1.msra.mxu0 %v1578
          %1635 = vmatprep.subr.mxu0 0.0
          %1636 = vmatpush1.msra.mxu0 %v1577
          %1637 = vmatprep.subr.mxu0 0.0
          %1638 = vmatpush1.msra.mxu0 %v1576
          %1639 = vmatprep.subr.mxu0 0.0
          %1640 = vmatpush1.msra.mxu0 %v1575
          %1641 = vmatprep.subr.mxu0 0.0
          %1642 = vmatpush1.msra.mxu0 %v1574
          %1643 = vmatprep.subr.mxu0 0.0
          %1644 = vmatpush1.msra.mxu0 %v1573
          %1645 = vmatprep.subr.mxu0 0.0
          %1646 = vmatpush2.msra.mxu0 %v1604
          %1647 = vmatprep.subr.mxu0 0.0
          %1648 = vmatpush2.msra.mxu0 %v1603
          %1649 = vmatprep.subr.mxu0 0.0
          %1650 = vmatpush2.msra.mxu0 %v1602
          %1651 = vmatprep.subr.mxu0 0.0
          %1652 = vmatpush2.msra.mxu0 %v1601
          %1653 = vmatprep.subr.mxu0 0.0
          %1654 = vmatpush2.msra.mxu0 %v1600
          %1655 = vmatprep.subr.mxu0 0.0
          %1656 = vmatpush2.msra.mxu0 %v1599
          %1657 = vmatprep.subr.mxu0 0.0
          %1658 = vmatpush2.msra.mxu0 %v1598
          %1659 = vmatprep.subr.mxu0 0.0
          %1660 = vmatpush2.msra.mxu0 %v1597
          %1661 = vmatprep.subr.mxu0 0.0
          %1662 = vmatpush2.msra.mxu0 %v1596
          %1663 = vmatprep.subr.mxu0 0.0
          %1664 = vmatpush2.msra.mxu0 %v1595
          %1665 = vmatprep.subr.mxu0 0.0
          %1666 = vmatpush2.msra.mxu0 %v1594
          %1667 = vmatprep.subr.mxu0 0.0
          %1668 = vmatpush2.msra.mxu0 %v1593
          %1669 = vmatprep.subr.mxu0 0.0
          %1670 = vmatpush2.msra.mxu0 %v1592
          %1671 = vmatprep.subr.mxu0 0.0
          %1672 = vmatpush2.msra.mxu0 %v1591
          %1673 = vmatprep.subr.mxu0 0.0
          %1674 = vmatpush2.msra.mxu0 %v1590
          %1675 = vmatprep.subr.mxu0 0.0
          %1676 = vmatpush2.msra.mxu0 %v1589
          %1677 = vmatprep.mubr.f32.mxu0 %v1568
          %1678 = vmatmul.mubr.f32.gmra.mxu0 %v779
          %v1679 = vpop.f32.mrf.mxu0
          %v1680 = vadd.f32 %v1611, %v1679
          %v1681 = vpop.f32.mrf.mxu0
          %1682 = vdwg.mxu0
          %vm1683 = vcmp.gt.f32.partialorder %v1680, 0.0
          %v1684 = vmul.f32 %v1680, 0.2
          %v1685 = vsel %vm1683, %v1680, %v1684
          %s1686 = scalar_lea.vmem %s18, %s1213
          %v1687 = vld [vmem:[%s1686] sm:$0xff]
          %v1688 = vld [vmem:[%s1686 + $0x8] sm:$0xff]
          %v1689 = vld [vmem:[%s1686 + $0x10] sm:$0xff]
          %v1690 = vld [vmem:[%s1686 + $0x18] sm:$0xff]
          %s1691 = scalar_lea.vmem %s19, %s774
          %v1692 = vld [vmem:[%s1691] sm:$0x1]
          %v1694 = vlaneseq
          %v1695 = vshrl.u32 %v1694, 7
          %v1696 = vsub.s32 0, %v1695
          %v1697 = vrot.slane %v1692, %v1696
          %v1700 = vsel %vm1227, %v1685, 0
          %1702 = vmatprep.subr.mxu0 0.0
          %1703 = vmatpush1.msra.mxu0 0.0
          %1704 = vmatprep.subr.mxu0 0.0
          %1705 = vmatpush1.msra.mxu0 0.0
          %1706 = vmatprep.subr.mxu0 0.0
          %1707 = vmatpush1.msra.mxu0 0.0
          %1708 = vmatprep.subr.mxu0 0.0
          %1709 = vmatpush1.msra.mxu0 0.0
          %1710 = vmatprep.subr.mxu0 0.0
          %1711 = vmatpush1.msra.mxu0 0.0
          %1712 = vmatprep.subr.mxu0 0.0
          %1713 = vmatpush1.msra.mxu0 0.0
          %1714 = vmatprep.subr.mxu0 0.0
          %1715 = vmatpush1.msra.mxu0 0.0
          %1716 = vmatprep.subr.mxu0 0.0
          %1717 = vmatpush1.msra.mxu0 0.0
          %1718 = vmatprep.subr.mxu0 0.0
          %1719 = vmatpush1.msra.mxu0 0.0
          %1720 = vmatprep.subr.mxu0 0.0
          %1721 = vmatpush1.msra.mxu0 0.0
          %1722 = vmatprep.subr.mxu0 0.0
          %1723 = vmatpush1.msra.mxu0 0.0
          %1724 = vmatprep.subr.mxu0 0.0
          %1725 = vmatpush1.msra.mxu0 0.0
          %1726 = vmatprep.subr.mxu0 0.0
          %1727 = vmatpush1.msra.mxu0 %v1690
          %1728 = vmatprep.subr.mxu0 0.0
          %1729 = vmatpush1.msra.mxu0 %v1689
          %1730 = vmatprep.subr.mxu0 0.0
          %1731 = vmatpush1.msra.mxu0 %v1688
          %1732 = vmatprep.subr.mxu0 0.0
          %1733 = vmatpush1.msra.mxu0 %v1687
          %1734 = vmatprep.subr.mxu0 0.0
          %1735 = vmatpush2.msra.mxu0 0.0
          %1736 = vmatprep.subr.mxu0 0.0
          %1737 = vmatpush2.msra.mxu0 0.0
          %1738 = vmatprep.subr.mxu0 0.0
          %1739 = vmatpush2.msra.mxu0 0.0
          %1740 = vmatprep.subr.mxu0 0.0
          %1741 = vmatpush2.msra.mxu0 0.0
          %1742 = vmatprep.subr.mxu0 0.0
          %1743 = vmatpush2.msra.mxu0 0.0
          %1744 = vmatprep.subr.mxu0 0.0
          %1745 = vmatpush2.msra.mxu0 0.0
          %1746 = vmatprep.subr.mxu0 0.0
          %1747 = vmatpush2.msra.mxu0 0.0
          %1748 = vmatprep.subr.mxu0 0.0
          %1749 = vmatpush2.msra.mxu0 0.0
          %1750 = vmatprep.subr.mxu0 0.0
          %1751 = vmatpush2.msra.mxu0 0.0
          %1752 = vmatprep.subr.mxu0 0.0
          %1753 = vmatpush2.msra.mxu0 0.0
          %1754 = vmatprep.subr.mxu0 0.0
          %1755 = vmatpush2.msra.mxu0 0.0
          %1756 = vmatprep.subr.mxu0 0.0
          %1757 = vmatpush2.msra.mxu0 0.0
          %1758 = vmatprep.subr.mxu0 0.0
          %1759 = vmatpush2.msra.mxu0 0.0
          %1760 = vmatprep.subr.mxu0 0.0
          %1761 = vmatpush2.msra.mxu0 0.0
          %1762 = vmatprep.subr.mxu0 0.0
          %1763 = vmatpush2.msra.mxu0 0.0
          %1764 = vmatprep.subr.mxu0 0.0
          %1765 = vmatpush2.msra.mxu0 0.0
          %1766 = vmatprep.mubr.f32.mxu0 0.0
          %1767 = vmatmul.mubr.f32.gmra.mxu0 %v1700
          %v1768 = vpop.f32.mrf.mxu0
          %v1769 = vadd.f32 %v1697, %v1768
          %v1770 = vpop.f32.mrf.mxu0
          %1771 = vdwg.mxu0
          %v1772 = vadd.f32 %v779, %v1769
          %v1773 = vmul.f32 %v1568, %v671
          %v1774 = vadd.f32 %v1772, %v1773
        $region113: #{gmn_forward.1} parent=99 // loop_footer
          %s778 = sadd.s32 1, %s774
        $region114: #{gmn_forward.1} parent=99 // loop_footer_branch
          %773 = sbr.rel target = $region110
        $region115: #{gmn_forward.1} parent=99 // loop_exit
          _
        %1775 = vst [vmem:[%s657] sm:$0x1f] %v779
        // Predicated region
        $region116: #{gmn_forward.1} parent=99 // pred_check
          %p1776 = pneg %p675
        $region117: #{gmn_forward.1} parent=99 // pred_check_branch
          %1778 = sbr.rel (%p1776) target = $region119
        $region118: #{gmn_forward.1} parent=99 // pred_region
          %1779 = vst [vmem:[%s21] sm:$0x1f] 0.0
          %1780 = vst [vmem:[%s21 + $0x8] sm:$0x1f] 0.0
        $region119: #{gmn_forward.1} parent=99 // pred_fallthru
          _
        %v1781 = vld [vmem:[%s21] sm:$0x1f]
        %s1782 = sld [smem:[#allocation3 + %s37]]
        %v1783 = vstv %s1782
        %v1784 = vmul.f32 %v1783, %v779
        %v1785 = vadd.f32 %v1781, %v1784
        %1786 = vst [vmem:[%s21] sm:$0x1f] %v1785
        %s1787 = scalar_lea.vmem %s21, 8
        %v1788 = vld [vmem:[%s1787] sm:$0x1f]
        %s1789 = sshra.s32 %s37, 7
        %s1790 = sand.u32 %s37, 127
        %s1791 = sadd.s32 %s1789, 1
        %s1792 = smul.u32 %s1791, 128
        %s1793 = sshra.s32 %s37, 7
        %s1794 = sand.u32 %s37, 127
        %s1795 = sadd.s32 %s1792, %s1794
        %s1796 = sld [smem:[#allocation3 + %s1795]]
        %v1797 = vstv %s1796
        %v1798 = vmul.f32 %v1797, %v779
        %v1799 = vadd.f32 %v1788, %v1798
        %1800 = vst [vmem:[%s1787] sm:$0x1f] %v1799
        %s1801 = sand.u32 %s470, 1
        %s1802 = scalar_lea.sflag [#allocation4], %s1801
        %s1803 = sand.u32 %s470, 1
        %s1804 = smul.addr %s1803, 8
        %s1805 = scalar_lea.vmem [#allocation6], %s1804
        // Predicated region
        $region120: #{gmn_forward.1} parent=99 // pred_check
          %p1806 = pneg %p480
        $region121: #{gmn_forward.1} parent=99 // pred_check_branch
          %1808 = sbr.rel (%p1806) target = $region123
        $region122: #{gmn_forward.1} parent=99 // pred_region
          %s1810 = ssub.s32 128, 128
          %1811 = vsyncadd %s1802, %s1810
          %s1812 = smul.addr %s37, 128
          %s1813 = scalar_lea.hbm %s20, %s1812
          %s1815 = sshll.u32 %s1805, 4
          %s1816 = int_to_ptr.vmem [resolvable:$true] %s1815
          %1818 = dma.vmem_to_hbm [thread:$0]  %s1816, 128, %s1813, %s1802
        $region123: #{gmn_forward.1} parent=99 // pred_fallthru
          _
        // Predicated region
        $region124: #{gmn_forward.1} parent=99 // pred_check
          %p1819 = pneg %p501
        $region125: #{gmn_forward.1} parent=99 // pred_check_branch
          %1821 = sbr.rel (%p1819) target = $region127
        $region126: #{gmn_forward.1} parent=99 // pred_region
          _
        $region127: #{gmn_forward.1} parent=99 // pred_fallthru
          _
        // Predicated region
        $region128: #{gmn_forward.1} parent=99 // pred_check
          %p1822 = pneg %p501
        $region129: #{gmn_forward.1} parent=99 // pred_check_branch
          %1824 = sbr.rel (%p1822) target = $region131
        $region130: #{gmn_forward.1} parent=99 // pred_region
          _
        $region131: #{gmn_forward.1} parent=99 // pred_fallthru
          _
      $region100: #{gmn_forward.1} parent=5 // pred_fallthru
        _
      %p1825 = scmp.le.s32.totalorder 2, %s32
      // Predicated region
      $region132: #{gmn_forward.1} parent=5 // pred_check
        %p1826 = pneg %p1825
      $region133: #{gmn_forward.1} parent=5 // pred_check_branch
        %1828 = sbr.rel (%p1826) target = $region135
      $region134: #{gmn_forward.1} parent=5 // pred_region
        %s1829 = ssub.s32 %s32, 2
        // Predicated region
        $region136: #{gmn_forward.1} parent=134 // pred_check
          %p1830 = pneg %p486
        $region137: #{gmn_forward.1} parent=134 // pred_check_branch
          %1832 = sbr.rel (%p1830) target = $region139
        $region138: #{gmn_forward.1} parent=134 // pred_region
          %s1833 = sand.u32 %s471, 1
          %s1834 = scalar_lea.sflag [#allocation4], %s1833
          %s1835 = sand.u32 %s471, 1
          %s1836 = smul.addr %s1835, 8
          %s1837 = scalar_lea.vmem [#allocation6], %s1836
          %1838 = dma.done %s1834, 128
        $region139: #{gmn_forward.1} parent=134 // pred_fallthru
          _
      $region135: #{gmn_forward.1} parent=5 // pred_fallthru
        _
    $region6: #{gmn_forward.1} parent=1 // loop_footer
      %s36 = sadd.s32 1, %s32
    $region7: #{gmn_forward.1} parent=1 // loop_footer_branch
      %31 = sbr.rel target = $region3
    $region8: #{gmn_forward.1} parent=1 // loop_exit
      _
    %1839 = vsyncpa [#allocation4], 1
    %s1840 = scalar_lea.sflag [#allocation4], 1
    %1841 = vsyncpa %s1840, 1
    %1842 = vsyncpa [#allocation5], 1
    %s1843 = scalar_lea.sflag [#allocation5], 1
    %1844 = vsyncpa %s1843, 1

</llo_original>
